<compile_context>
chip_gen: v7x
topology: tpu7x:2x2x1
jax: 0.10.0
libtpu: 0.0.40
codegen_flags: <defaults>
</compile_context>

<pallas_src>
import jax
import jax.numpy as jnp
from jax.experimental import pallas as pl
from jax.experimental.pallas import tpu as pltpu

LANE = 128  # lane-dense padding for weight output dims / kernel output


def _pad_up(n, m):
    return ((n + m - 1) // m) * m


def _make_kernel(n_out, z_p):
    """VAE path kernel; n_out / z_p are static (baked in via closure)."""

    def kernel(x_ref, eps_ref,
               w1_ref, b1_ref, w2_ref, b2_ref,
               w3_ref, b3_ref, w4_ref, b4_ref,
               o_ref):
        f32 = jnp.float32
        # Encoder (dropout in eval mode == identity).
        x = x_ref[...].astype(jnp.bfloat16)                                # [tb, din]
        h1 = jnp.dot(x, w1_ref[...], preferred_element_type=f32) + b1_ref[...]
        h1 = jnp.maximum(h1, 0.0)                                          # [tb, h_p]
        # Fused fc21|fc22: single 2*z_p-wide MXU pass.
        ml = jnp.dot(h1.astype(jnp.bfloat16), w2_ref[...],
                     preferred_element_type=f32) + b2_ref[...]             # [tb, 2*z_p]
        mu = ml[:, :n_out]                                                 # [tb, n_out]
        logvar = ml[:, z_p:z_p + n_out]                                    # [tb, n_out]
        # Reparameterize at logical width (eps supplied by caller, f32 math).
        z = mu + eps_ref[...] * jnp.exp(0.5 * logvar)                      # [tb, n_out]
        # Decoder.
        h3 = jnp.dot(z.astype(jnp.bfloat16), w3_ref[...],
                     preferred_element_type=f32) + b3_ref[...]
        h3 = jnp.maximum(h3, 0.0)                                          # [tb, h_p]
        y = jnp.dot(h3.astype(jnp.bfloat16), w4_ref[...],
                    preferred_element_type=f32) + b4_ref[...]              # [tb, g_p]
        # Sigmoid: exp on EUP, approx reciprocal on EUP (frees VALU slots).
        o_ref[...] = pl.reciprocal(1.0 + jnp.exp(-y), approx=True).astype(o_ref.dtype)

    return kernel


def cross_over_forward(gL1, gL2, gD1, gD2, eps_L, eps_D, params,
                       len_gene_L, len_gene_D, num_hidden, *, tb=512):
    """Fused forward for both gene paths. Returns (offspring_L, offspring_D)."""
    B = gL1.shape[0]
    n_out = eps_L.shape[1]
    din_L, din_D = 2 * len_gene_L, 2 * len_gene_D
    din_max = max(din_L, din_D)

    h_p = params["w1"].shape[-1]
    two_z_p = params["w2122"].shape[-1]
    z_p = two_z_p // 2
    g_p = params["w4"].shape[-1]

    def pad_cols(a, w):
        return a if a.shape[1] == w else jnp.pad(a, ((0, 0), (0, w - a.shape[1])))

    # Logical-width streamed inputs, stacked along the path axis (no lane padding).
    sup_L = jnp.concatenate([gL1, gL2], axis=-1)
    sup_D = jnp.concatenate([gD1, gD2], axis=-1)
    x = jnp.stack([pad_cols(sup_L, din_max), pad_cols(sup_D, din_max)], axis=0)  # [2,B,din_max]
    eps = jnp.stack([eps_L, eps_D], axis=0)                                      # [2,B,n_out]

    # Row tile: multiple of 8 sublanes; 1-2 batch steps per path at the default tb.
    tb = max(8, min(_pad_up(tb, 8), _pad_up(B, 8)))
    b_p = _pad_up(B, tb)
    if b_p != B:
        x = jnp.pad(x, ((0, 0), (0, b_p - B), (0, 0)))
        eps = jnp.pad(eps, ((0, 0), (0, b_p - B), (0, 0)))

    nb = b_p // tb
    row_spec = lambda d: pl.BlockSpec((None, tb, d), lambda p, i: (p, i, 0))
    res_spec = lambda arr: pl.BlockSpec((None,) + arr.shape[1:], lambda p, i: (p, 0, 0))

    # Logical FLOPs / actual DMA bytes (padded slabs are gone except the output).
    flops = 0
    for din, g in ((din_L, len_gene_L), (din_D, len_gene_D)):
        flops += 2 * B * (din * num_hidden + num_hidden * 2 * n_out
                          + n_out * num_hidden + num_hidden * g)
    trans = B * ((n_out + len_gene_L) + (n_out + len_gene_D))
    param_bytes = sum(int(params[k].size) * params[k].dtype.itemsize
                      for k in ("w1", "b1", "w2122", "b2122", "w3", "b3", "w4", "b4"))
    bytes_accessed = int(x.size) * 4 + int(eps.size) * 4 + 2 * b_p * g_p * 2 + param_bytes
    cost = pl.CostEstimate(flops=flops, transcendentals=trans,
                           bytes_accessed=bytes_accessed)

    out = pl.pallas_call(
        _make_kernel(n_out, z_p),
        out_shape=jax.ShapeDtypeStruct((2, b_p, g_p), jnp.bfloat16),
        grid_spec=pltpu.PrefetchScalarGridSpec(
            num_scalar_prefetch=0,
            grid=(2, nb),                      # (path, batch tiles)
            in_specs=[
                row_spec(din_max), row_spec(n_out),
                res_spec(params["w1"]), res_spec(params["b1"]),
                res_spec(params["w2122"]), res_spec(params["b2122"]),
                res_spec(params["w3"]), res_spec(params["b3"]),
                res_spec(params["w4"]), res_spec(params["b4"]),
            ],
            out_specs=pl.BlockSpec((None, tb, g_p), lambda p, i: (p, i, 0)),
        ),
        compiler_params=pltpu.CompilerParams(
            dimension_semantics=("parallel", "parallel")),  # v7x: 2 TCs share the work
        cost_estimate=cost,
    )(x, eps,
      params["w1"], params["b1"], params["w2122"], params["b2122"],
      params["w3"], params["b3"], params["w4"], params["b4"])

    off_L = out[0, :B, :len_gene_L].astype(jnp.float32)
    off_D = out[1, :B, :len_gene_D].astype(jnp.float32)
    return off_L, off_D


def init_cross_over_params(key, len_gene_L, len_gene_D, num_hidden, num_out):
    """PyTorch-Linear-style init; weights [in, out] (transpose of nn.Linear).
    Output dims lane-padded to 128, contraction dims kept logical where the
    activations are logical-width; fc21|fc22 fused column-wise; L/D stacked
    along a leading path axis. Weights bf16, biases f32."""
    h_p = _pad_up(num_hidden, LANE)
    z_p = _pad_up(num_out, LANE)
    g_p = _pad_up(max(len_gene_L, len_gene_D), LANE)
    din_max = max(2 * len_gene_L, 2 * len_gene_D)

    def linear(kw, kb, fan_in, fan_out, rows, cols, col_off=0):
        bound = float(1.0 / (fan_in ** 0.5))
        w = jax.random.uniform(kw, (fan_in, fan_out), jnp.float32, -bound, bound)
        b = jax.random.uniform(kb, (fan_out,), jnp.float32, -bound, bound)
        wp = jnp.zeros((rows, cols), jnp.bfloat16).at[
            :fan_in, col_off:col_off + fan_out].set(w.astype(jnp.bfloat16))
        bp = jnp.zeros((1, cols), jnp.float32).at[0, col_off:col_off + fan_out].set(b)
        return wp, bp

    def one_path(k, len_gene):
        din = 2 * len_gene
        ks = jax.random.split(k, 10)
        w1, b1 = linear(ks[0], ks[1], din, num_hidden, din_max, h_p)
        w21, b21 = linear(ks[2], ks[3], num_hidden, num_out, h_p, 2 * z_p, col_off=0)
        w22, b22 = linear(ks[4], ks[5], num_hidden, num_out, h_p, 2 * z_p, col_off=z_p)
        w2122, b2122 = w21 + w22, b21 + b22            # disjoint column ranges
        w3, b3 = linear(ks[6], ks[7], num_out, num_hidden, num_out, h_p)
        w4, b4 = linear(ks[8], ks[9], num_hidden, len_gene, h_p, g_p)
        return dict(w1=w1, b1=b1, w2122=w2122, b2122=b2122,
                    w3=w3, b3=b3, w4=w4, b4=b4)

    kL, kD = jax.random.split(key)
    pL = one_path(kL, len_gene_L)
    pD = one_path(kD, len_gene_D)
    return {k: jnp.stack([pL[k], pD[k]], axis=0) for k in pL}


# ------------------------- plain-JAX reference -------------------------------
def _ref_forward(gL1, gL2, gD1, gD2, eps_L, eps_D, p,
                 len_gene_L, len_gene_D, num_out):
    z_p = p["w2122"].shape[-1] // 2
    din_max = p["w1"].shape[1]
    f32 = jnp.float32

    def path(idx, sup, eps, len_gene):
        x = sup
        if x.shape[1] < din_max:
            x = jnp.pad(x, ((0, 0), (0, din_max - x.shape[1])))
        x = x.astype(jnp.bfloat16)
        h1 = jnp.maximum(
            jnp.dot(x, p["w1"][idx], preferred_element_type=f32) + p["b1"][idx], 0.0)
        ml = jnp.dot(h1.astype(jnp.bfloat16), p["w2122"][idx],
                     preferred_element_type=f32) + p["b2122"][idx]
        mu, logvar = ml[:, :num_out], ml[:, z_p:z_p + num_out]
        z = mu + eps * jnp.exp(0.5 * logvar)
        h3 = jnp.maximum(
            jnp.dot(z.astype(jnp.bfloat16), p["w3"][idx],
                    preferred_element_type=f32) + p["b3"][idx], 0.0)
        y = jnp.dot(h3.astype(jnp.bfloat16), p["w4"][idx],
                    preferred_element_type=f32) + p["b4"][idx]
        return jax.nn.sigmoid(y)[:, :len_gene]

    return (path(0, jnp.concatenate([gL1, gL2], -1), eps_L, len_gene_L),
            path(1, jnp.concatenate([gD1, gD2], -1), eps_D, len_gene_D))


if __name__ == "__main__":
    key = jax.random.PRNGKey(0)
    k_in, k_eps, k_p = jax.random.split(key, 3)

    # Small logical sizes implied by the module; batched so the kernel does
    # real work.  Grid = (2 paths, 1 batch tile of 256 rows).
    B = 256
    len_gene_L, len_gene_D = 8, 8
    num_hidden, num_out = 32, 16

    kL1, kL2, kD1, kD2 = jax.random.split(k_in, 4)
    gL1 = jax.random.normal(kL1, (B, len_gene_L), jnp.float32)
    gL2 = jax.random.normal(kL2, (B, len_gene_L), jnp.float32)
    gD1 = jax.random.normal(kD1, (B, len_gene_D), jnp.float32)
    gD2 = jax.random.normal(kD2, (B, len_gene_D), jnp.float32)

    keL, keD = jax.random.split(k_eps)
    eps_L = jax.random.normal(keL, (B, num_out), jnp.float32)
    eps_D = jax.random.normal(keD, (B, num_out), jnp.float32)

    params = init_cross_over_params(k_p, len_gene_L, len_gene_D, num_hidden, num_out)

    off_L, off_D = cross_over_forward(gL1, gL2, gD1, gD2, eps_L, eps_D, params,
                                      len_gene_L, len_gene_D, num_hidden)
    jax.block_until_ready((off_L, off_D))

    # Cross-check against the plain-JAX reference (same bf16/f32 recipe;
    # kernel output is bf16 so tolerances reflect bf16 quantization).
    ref_L, ref_D = _ref_forward(gL1, gL2, gD1, gD2, eps_L, eps_D, params,
                                len_gene_L, len_gene_D, num_out)

    assert off_L.shape == (B, len_gene_L) and off_D.shape == (B, len_gene_D)
    assert jnp.allclose(off_L, ref_L, atol=1e-2, rtol=1e-2)
    assert jnp.allclose(off_D, ref_D, atol=1e-2, rtol=1e-2)

    print("KERNEL_OK")
</pallas_src>

<mosaic_0001>
module attributes {stable_mosaic.version = 11 : i64} {
  func.func @kernel(%arg0: i32, %arg1: i32, %arg2: memref<1x256x16xf32, #tpu.memory_space<vmem>>, %arg3: memref<1x256x16xf32, #tpu.memory_space<vmem>>, %arg4: memref<1x16x128xbf16, #tpu.memory_space<vmem>>, %arg5: memref<1x1x128xf32, #tpu.memory_space<vmem>>, %arg6: memref<1x128x256xbf16, #tpu.memory_space<vmem>>, %arg7: memref<1x1x256xf32, #tpu.memory_space<vmem>>, %arg8: memref<1x16x128xbf16, #tpu.memory_space<vmem>>, %arg9: memref<1x1x128xf32, #tpu.memory_space<vmem>>, %arg10: memref<1x128x128xbf16, #tpu.memory_space<vmem>>, %arg11: memref<1x1x128xf32, #tpu.memory_space<vmem>>, %arg12: memref<1x256x128xbf16, #tpu.memory_space<vmem>>) attributes {dimension_semantics = [#tpu.dimension_semantics<parallel>, #tpu.dimension_semantics<parallel>], iteration_bounds = array<i64: 2, 1>, scalar_prefetch = 0 : i64, scratch_operands = 0 : i64, tpu.core_type = #tpu.core_type<tc>, window_params = [{transform_indices = @transform_0, window_bounds = array<i64: 1, 256, 16>}, {transform_indices = @transform_1, window_bounds = array<i64: 1, 256, 16>}, {transform_indices = @transform_2, window_bounds = array<i64: 1, 16, 128>}, {transform_indices = @transform_3, window_bounds = array<i64: 1, 1, 128>}, {transform_indices = @transform_4, window_bounds = array<i64: 1, 128, 256>}, {transform_indices = @transform_5, window_bounds = array<i64: 1, 1, 256>}, {transform_indices = @transform_6, window_bounds = array<i64: 1, 16, 128>}, {transform_indices = @transform_7, window_bounds = array<i64: 1, 1, 128>}, {transform_indices = @transform_8, window_bounds = array<i64: 1, 128, 128>}, {transform_indices = @transform_9, window_bounds = array<i64: 1, 1, 128>}, {transform_indices = @transform_10, window_bounds = array<i64: 1, 256, 128>}]} {
    %c0 = arith.constant 0 : index
    %c0_0 = arith.constant 0 : index
    %c0_1 = arith.constant 0 : index
    %0 = vector.load %arg2[%c0, %c0_0, %c0_1] : memref<1x256x16xf32, #tpu.memory_space<vmem>>, vector<1x256x16xf32>
    %1 = vector.shape_cast %0 : vector<1x256x16xf32> to vector<256x16xf32>
    %2 = arith.truncf %1 : vector<256x16xf32> to vector<256x16xbf16>
    %c0_2 = arith.constant 0 : index
    %c0_3 = arith.constant 0 : index
    %c0_4 = arith.constant 0 : index
    %3 = vector.load %arg4[%c0_2, %c0_3, %c0_4] : memref<1x16x128xbf16, #tpu.memory_space<vmem>>, vector<1x16x128xbf16>
    %4 = vector.shape_cast %3 : vector<1x16x128xbf16> to vector<16x128xbf16>
    %cst = arith.constant dense<0.000000e+00> : vector<256x128xf32>
    %5 = tpu.matmul %2, %4, %cst {dimension_numbers = #tpu.dot_dimension_numbers<[1], [0], [0], [1], [0, 0, 1, 1], [], []>} : vector<256x16xbf16>, vector<16x128xbf16>, vector<256x128xf32> -> vector<256x128xf32>
    %c0_5 = arith.constant 0 : index
    %c0_6 = arith.constant 0 : index
    %c0_7 = arith.constant 0 : index
    %6 = vector.load %arg5[%c0_5, %c0_6, %c0_7] : memref<1x1x128xf32, #tpu.memory_space<vmem>>, vector<1x1x128xf32>
    %7 = vector.shape_cast %6 : vector<1x1x128xf32> to vector<1x128xf32>
    %8 = vector.broadcast %7 : vector<1x128xf32> to vector<256x128xf32>
    %9 = arith.addf %5, %8 : vector<256x128xf32>
    %cst_8 = arith.constant 0.000000e+00 : f32
    %10 = vector.broadcast %cst_8 : f32 to vector<256x128xf32>
    %11 = arith.maximumf %9, %10 : vector<256x128xf32>
    %12 = arith.truncf %11 : vector<256x128xf32> to vector<256x128xbf16>
    %c0_9 = arith.constant 0 : index
    %c0_10 = arith.constant 0 : index
    %c0_11 = arith.constant 0 : index
    %13 = vector.load %arg6[%c0_9, %c0_10, %c0_11] : memref<1x128x256xbf16, #tpu.memory_space<vmem>>, vector<1x128x256xbf16>
    %14 = vector.shape_cast %13 : vector<1x128x256xbf16> to vector<128x256xbf16>
    %cst_12 = arith.constant dense<0.000000e+00> : vector<256x256xf32>
    %15 = tpu.matmul %12, %14, %cst_12 {dimension_numbers = #tpu.dot_dimension_numbers<[1], [0], [0], [1], [0, 0, 1, 1], [], []>} : vector<256x128xbf16>, vector<128x256xbf16>, vector<256x256xf32> -> vector<256x256xf32>
    %c0_13 = arith.constant 0 : index
    %c0_14 = arith.constant 0 : index
    %c0_15 = arith.constant 0 : index
    %16 = vector.load %arg7[%c0_13, %c0_14, %c0_15] : memref<1x1x256xf32, #tpu.memory_space<vmem>>, vector<1x1x256xf32>
    %17 = vector.shape_cast %16 : vector<1x1x256xf32> to vector<1x256xf32>
    %18 = vector.broadcast %17 : vector<1x256xf32> to vector<256x256xf32>
    %19 = arith.addf %15, %18 : vector<256x256xf32>
    %20 = vector.extract_strided_slice %19 {offsets = [0, 0], sizes = [256, 16], strides = [1, 1]} : vector<256x256xf32> to vector<256x16xf32>
    %21 = vector.extract_strided_slice %19 {offsets = [0, 128], sizes = [256, 16], strides = [1, 1]} : vector<256x256xf32> to vector<256x16xf32>
    %c0_16 = arith.constant 0 : index
    %c0_17 = arith.constant 0 : index
    %c0_18 = arith.constant 0 : index
    %22 = vector.load %arg3[%c0_16, %c0_17, %c0_18] : memref<1x256x16xf32, #tpu.memory_space<vmem>>, vector<1x256x16xf32>
    %23 = vector.shape_cast %22 : vector<1x256x16xf32> to vector<256x16xf32>
    %cst_19 = arith.constant 5.000000e-01 : f32
    %24 = vector.broadcast %cst_19 : f32 to vector<256x16xf32>
    %25 = arith.mulf %24, %21 : vector<256x16xf32>
    %26 = math.exp %25 : vector<256x16xf32>
    %27 = arith.mulf %23, %26 : vector<256x16xf32>
    %28 = arith.addf %20, %27 : vector<256x16xf32>
    %29 = arith.truncf %28 : vector<256x16xf32> to vector<256x16xbf16>
    %c0_20 = arith.constant 0 : index
    %c0_21 = arith.constant 0 : index
    %c0_22 = arith.constant 0 : index
    %30 = vector.load %arg8[%c0_20, %c0_21, %c0_22] : memref<1x16x128xbf16, #tpu.memory_space<vmem>>, vector<1x16x128xbf16>
    %31 = vector.shape_cast %30 : vector<1x16x128xbf16> to vector<16x128xbf16>
    %cst_23 = arith.constant dense<0.000000e+00> : vector<256x128xf32>
    %32 = tpu.matmul %29, %31, %cst_23 {dimension_numbers = #tpu.dot_dimension_numbers<[1], [0], [0], [1], [0, 0, 1, 1], [], []>} : vector<256x16xbf16>, vector<16x128xbf16>, vector<256x128xf32> -> vector<256x128xf32>
    %c0_24 = arith.constant 0 : index
    %c0_25 = arith.constant 0 : index
    %c0_26 = arith.constant 0 : index
    %33 = vector.load %arg9[%c0_24, %c0_25, %c0_26] : memref<1x1x128xf32, #tpu.memory_space<vmem>>, vector<1x1x128xf32>
    %34 = vector.shape_cast %33 : vector<1x1x128xf32> to vector<1x128xf32>
    %35 = vector.broadcast %34 : vector<1x128xf32> to vector<256x128xf32>
    %36 = arith.addf %32, %35 : vector<256x128xf32>
    %cst_27 = arith.constant 0.000000e+00 : f32
    %37 = vector.broadcast %cst_27 : f32 to vector<256x128xf32>
    %38 = arith.maximumf %36, %37 : vector<256x128xf32>
    %39 = arith.truncf %38 : vector<256x128xf32> to vector<256x128xbf16>
    %c0_28 = arith.constant 0 : index
    %c0_29 = arith.constant 0 : index
    %c0_30 = arith.constant 0 : index
    %40 = vector.load %arg10[%c0_28, %c0_29, %c0_30] : memref<1x128x128xbf16, #tpu.memory_space<vmem>>, vector<1x128x128xbf16>
    %41 = vector.shape_cast %40 : vector<1x128x128xbf16> to vector<128x128xbf16>
    %cst_31 = arith.constant dense<0.000000e+00> : vector<256x128xf32>
    %42 = tpu.matmul %39, %41, %cst_31 {dimension_numbers = #tpu.dot_dimension_numbers<[1], [0], [0], [1], [0, 0, 1, 1], [], []>} : vector<256x128xbf16>, vector<128x128xbf16>, vector<256x128xf32> -> vector<256x128xf32>
    %c0_32 = arith.constant 0 : index
    %c0_33 = arith.constant 0 : index
    %c0_34 = arith.constant 0 : index
    %43 = vector.load %arg11[%c0_32, %c0_33, %c0_34] : memref<1x1x128xf32, #tpu.memory_space<vmem>>, vector<1x1x128xf32>
    %44 = vector.shape_cast %43 : vector<1x1x128xf32> to vector<1x128xf32>
    %45 = vector.broadcast %44 : vector<1x128xf32> to vector<256x128xf32>
    %46 = arith.addf %42, %45 : vector<256x128xf32>
    %cst_35 = arith.constant 0.000000e+00 : f32
    %47 = vector.broadcast %cst_35 : f32 to vector<256x128xf32>
    %48 = arith.subf %47, %46 : vector<256x128xf32>
    %49 = math.exp %48 : vector<256x128xf32>
    %cst_36 = arith.constant 1.000000e+00 : f32
    %50 = vector.broadcast %cst_36 : f32 to vector<256x128xf32>
    %51 = arith.addf %50, %49 : vector<256x128xf32>
    %52 = tpu.reciprocal %51 {approx = true} : vector<256x128xf32> -> vector<256x128xf32>
    %53 = arith.truncf %52 : vector<256x128xf32> to vector<256x128xbf16>
    %c0_37 = arith.constant 0 : index
    %c0_38 = arith.constant 0 : index
    %c0_39 = arith.constant 0 : index
    %54 = vector.load %arg12[%c0_37, %c0_38, %c0_39] : memref<1x256x128xbf16, #tpu.memory_space<vmem>>, vector<1x256x128xbf16>
    %55 = vector.shape_cast %54 : vector<1x256x128xbf16> to vector<256x128xbf16>
    %56 = vector.shape_cast %53 : vector<256x128xbf16> to vector<1x256x128xbf16>
    tpu.vector_store %arg12[%c0_37, %c0_38, %c0_39], %56 {strides = array<i32>} : memref<1x256x128xbf16, #tpu.memory_space<vmem>>, vector<1x256x128xbf16>,
    return
  }
  func.func @transform_0(%arg0: i32, %arg1: i32) -> (i32, i32, i32) {
    %c0_i32 = arith.constant 0 : i32
    %c0_i32_0 = arith.constant 0 : i32
    return %arg0, %arg1, %c0_i32 : i32, i32, i32
  }
  func.func @transform_1(%arg0: i32, %arg1: i32) -> (i32, i32, i32) {
    %c0_i32 = arith.constant 0 : i32
    %c0_i32_0 = arith.constant 0 : i32
    return %arg0, %arg1, %c0_i32 : i32, i32, i32
  }
  func.func @transform_2(%arg0: i32, %arg1: i32) -> (i32, i32, i32) {
    %c0_i32 = arith.constant 0 : i32
    %c0_i32_0 = arith.constant 0 : i32
    %c0_i32_1 = arith.constant 0 : i32
    return %arg0, %c0_i32, %c0_i32_0 : i32, i32, i32
  }
  func.func @transform_3(%arg0: i32, %arg1: i32) -> (i32, i32, i32) {
    %c0_i32 = arith.constant 0 : i32
    %c0_i32_0 = arith.constant 0 : i32
    %c0_i32_1 = arith.constant 0 : i32
    return %arg0, %c0_i32, %c0_i32_0 : i32, i32, i32
  }
  func.func @transform_4(%arg0: i32, %arg1: i32) -> (i32, i32, i32) {
    %c0_i32 = arith.constant 0 : i32
    %c0_i32_0 = arith.constant 0 : i32
    %c0_i32_1 = arith.constant 0 : i32
    return %arg0, %c0_i32, %c0_i32_0 : i32, i32, i32
  }
  func.func @transform_5(%arg0: i32, %arg1: i32) -> (i32, i32, i32) {
    %c0_i32 = arith.constant 0 : i32
    %c0_i32_0 = arith.constant 0 : i32
    %c0_i32_1 = arith.constant 0 : i32
    return %arg0, %c0_i32, %c0_i32_0 : i32, i32, i32
  }
  func.func @transform_6(%arg0: i32, %arg1: i32) -> (i32, i32, i32) {
    %c0_i32 = arith.constant 0 : i32
    %c0_i32_0 = arith.constant 0 : i32
    %c0_i32_1 = arith.constant 0 : i32
    return %arg0, %c0_i32, %c0_i32_0 : i32, i32, i32
  }
  func.func @transform_7(%arg0: i32, %arg1: i32) -> (i32, i32, i32) {
    %c0_i32 = arith.constant 0 : i32
    %c0_i32_0 = arith.constant 0 : i32
    %c0_i32_1 = arith.constant 0 : i32
    return %arg0, %c0_i32, %c0_i32_0 : i32, i32, i32
  }
  func.func @transform_8(%arg0: i32, %arg1: i32) -> (i32, i32, i32) {
    %c0_i32 = arith.constant 0 : i32
    %c0_i32_0 = arith.constant 0 : i32
    %c0_i32_1 = arith.constant 0 : i32
    return %arg0, %c0_i32, %c0_i32_0 : i32, i32, i32
  }
  func.func @transform_9(%arg0: i32, %arg1: i32) -> (i32, i32, i32) {
    %c0_i32 = arith.constant 0 : i32
    %c0_i32_0 = arith.constant 0 : i32
    %c0_i32_1 = arith.constant 0 : i32
    return %arg0, %c0_i32, %c0_i32_0 : i32, i32, i32
  }
  func.func @transform_10(%arg0: i32, %arg1: i32) -> (i32, i32, i32) {
    %c0_i32 = arith.constant 0 : i32
    %c0_i32_0 = arith.constant 0 : i32
    return %arg0, %arg1, %c0_i32 : i32, i32, i32
  }
}

</mosaic_0001>

<llo_original>
// kernel: tpu_custom_call.1
$region0: #{tpu_custom_call.1}
  #allocation0 [shape = 'u32[]', space=smem, size = 0x4, offset = 0x4, fixed_abs, tag = 'smem constant byte address 0x4 - core index']
  #allocation1 [shape = 'u32[144,128]{1,0:T(1,128)}', space=vmem, size = 0x12000, scoped, tag = 'internal scratch']
  %s0 = inlined_call_operand.vmem [shape: f32[2,256,16], index: 0, kind: input, shape index: {}]
  %s1 = inlined_call_operand.vmem [shape: f32[2,256,16], index: 1, kind: input, shape index: {}]
  %s2 = inlined_call_operand.vmem [shape: bf16[2,16,128], index: 2, kind: input, shape index: {}]
  %s3 = inlined_call_operand.vmem [shape: f32[2,1,128], index: 3, kind: input, shape index: {}]
  %s4 = inlined_call_operand.vmem [shape: bf16[2,128,256], index: 4, kind: input, shape index: {}]
  %s5 = inlined_call_operand.vmem [shape: f32[2,1,256], index: 5, kind: input, shape index: {}]
  %s6 = inlined_call_operand.vmem [shape: bf16[2,16,128], index: 6, kind: input, shape index: {}]
  %s7 = inlined_call_operand.vmem [shape: f32[2,1,128], index: 7, kind: input, shape index: {}]
  %s8 = inlined_call_operand.vmem [shape: bf16[2,128,128], index: 8, kind: input, shape index: {}]
  %s9 = inlined_call_operand.vmem [shape: f32[2,1,128], index: 9, kind: input, shape index: {}]
  %s10 = inlined_call_operand.hbm [shape: bf16[2,256,128], index: 10, kind: output, shape index: {}]
  %s11 = sld [smem:[#allocation0]]
  $region73: #{tpu_custom_call.1} parent=0
    _
  %s13 = ssub.s32 1, %s11
  %s14 = scalar_select 0, %s13, %s11
  $region1: #{tpu_custom_call.1} parent=0
    #allocation2 [shape = 'u8[131072]{0}', space=vmem, size = 0x20000, scoped, tag = 'output window, operand 0']
    #allocation3 [shape = 's32[2]{0}', space=sflag, size = 0x8, scoped, tag = 'scoped memory for tpu_custom_call.1']
    %15 = vsyncpa [#allocation3], 0
    %s16 = scalar_lea.sflag [#allocation3], 1
    %17 = vsyncpa %s16, 0
    loop: start=0, step=1, limit=4
    $region2: #{tpu_custom_call.1} parent=1 // loop_pre_header
      _
    $region3: #{tpu_custom_call.1} parent=1 // loop_header
      %s19 = sphi 0, %s23
      %p20 = scmp.ge.s32.totalorder %s19, 4
      %s26 = sphi 0, %s38
      %s27 = sphi 0, %s34
      %s28 = sphi 0, %s26
      %s29 = sphi 0, %s27
      %s30 = sphi 0, %s28
      %s31 = sphi 0, %s29
      %s43 = sphi 0, %s45
      %s46 = sphi 0, %s43
      %s47 = sphi 0, %s46
      %s63 = sphi 0, %s47
      %s71 = sphi 0, %s73
      %s74 = sphi 0, %s71
      %s75 = sphi 0, %s74
      %s91 = sphi 0, %s75
      %s97 = sphi 0, %s99
      %s100 = sphi 0, %s97
      %s101 = sphi 0, %s100
      %s117 = sphi 0, %s101
      %s123 = sphi 0, %s125
      %s126 = sphi 0, %s123
      %s127 = sphi 0, %s126
      %s143 = sphi 0, %s127
      %s149 = sphi 0, %s151
      %s152 = sphi 0, %s149
      %s153 = sphi 0, %s152
      %s169 = sphi 0, %s153
      %s175 = sphi 0, %s177
      %s178 = sphi 0, %s175
      %s179 = sphi 0, %s178
      %s195 = sphi 0, %s179
      %s201 = sphi 0, %s203
      %s204 = sphi 0, %s201
      %s205 = sphi 0, %s204
      %s221 = sphi 0, %s205
      %s227 = sphi 0, %s229
      %s230 = sphi 0, %s227
      %s231 = sphi 0, %s230
      %s247 = sphi 0, %s231
      %s253 = sphi 0, %s255
      %s256 = sphi 0, %s253
      %s257 = sphi 0, %s256
      %s273 = sphi 0, %s257
      %s279 = sphi 0, %s281
      %s282 = sphi 0, %s279
      %s283 = sphi 0, %s282
      %s299 = sphi 0, %s283
      %s307 = sphi 0, %s309
      %s310 = sphi 0, %s307
      %s311 = sphi 0, %s310
      %s327 = sphi 0, %s311
    $region4: #{tpu_custom_call.1} parent=1 // loop_header_branch
      %22 = sbr.rel (%p20) target = $region8
    $region5: #{tpu_custom_call.1} parent=1 // loop_body
      %s24 = ssub.s32 %s19, 1
      %s25 = ssub.s32 %s19, 2
      %s32 = sadd.s32 1, %s27
      %p33 = scmp.ge.s32.totalorder %s32, 1
      %s34 = scalar_select %p33, 0, %s32
      %s35 = sadd.s32 1, %s26
      %s36 = scalar_select %p33, %s35, %s26
      %p37 = scmp.ge.s32.totalorder %s36, 2
      %s38 = scalar_select %p37, 0, %s36
      %s39 = ssub.s32 %s26, %s38
      %s40 = ssub.s32 %s27, %s34
      %s41 = sor.u32 %s39, %s40
      %p42 = scmp.eq.s32.totalorder %s41, 0
      %s44 = sadd.s32 %s43, 1
      %s45 = scalar_select %p42, %s43, %s44
      %p48 = pneg %p42
      %p49 = scmp.eq.s32.totalorder %s19, 1
      %p50 = por %p48, %p49
      %p51 = scmp.ne.s32.totalorder %s43, %s46
      %p52 = scmp.eq.s32.totalorder %s19, 0
      %p53 = por %p51, %p52
      %p54 = scmp.ne.s32.totalorder %s43, %s46
      %p55 = scmp.eq.s32.totalorder %s24, 1
      %p56 = por %p54, %p55
      %p57 = scmp.ne.s32.totalorder %s46, %s47
      %p58 = scmp.eq.s32.totalorder %s24, 0
      %p59 = por %p57, %p58
      %p60 = scmp.ne.s32.totalorder %s46, %s47
      %p61 = scmp.eq.s32.totalorder %s25, 1
      %p62 = por %p60, %p61
      %p64 = scmp.ne.s32.totalorder %s47, %s63
      %p65 = scmp.eq.s32.totalorder %s25, 0
      %p66 = por %p64, %p65
      %s67 = ssub.s32 %s26, %s38
      %s68 = ssub.s32 %s27, %s34
      %s69 = sor.u32 %s67, %s68
      %p70 = scmp.eq.s32.totalorder %s69, 0
      %s72 = sadd.s32 %s71, 1
      %s73 = scalar_select %p70, %s71, %s72
      %p76 = pneg %p70
      %p77 = scmp.eq.s32.totalorder %s19, 1
      %p78 = por %p76, %p77
      %p79 = scmp.ne.s32.totalorder %s71, %s74
      %p80 = scmp.eq.s32.totalorder %s19, 0
      %p81 = por %p79, %p80
      %p82 = scmp.ne.s32.totalorder %s71, %s74
      %p83 = scmp.eq.s32.totalorder %s24, 1
      %p84 = por %p82, %p83
      %p85 = scmp.ne.s32.totalorder %s74, %s75
      %p86 = scmp.eq.s32.totalorder %s24, 0
      %p87 = por %p85, %p86
      %p88 = scmp.ne.s32.totalorder %s74, %s75
      %p89 = scmp.eq.s32.totalorder %s25, 1
      %p90 = por %p88, %p89
      %p92 = scmp.ne.s32.totalorder %s75, %s91
      %p93 = scmp.eq.s32.totalorder %s25, 0
      %p94 = por %p92, %p93
      %s95 = ssub.s32 %s26, %s38
      %p96 = scmp.eq.s32.totalorder %s95, 0
      %s98 = sadd.s32 %s97, 1
      %s99 = scalar_select %p96, %s97, %s98
      %p102 = pneg %p96
      %p103 = scmp.eq.s32.totalorder %s19, 1
      %p104 = por %p102, %p103
      %p105 = scmp.ne.s32.totalorder %s97, %s100
      %p106 = scmp.eq.s32.totalorder %s19, 0
      %p107 = por %p105, %p106
      %p108 = scmp.ne.s32.totalorder %s97, %s100
      %p109 = scmp.eq.s32.totalorder %s24, 1
      %p110 = por %p108, %p109
      %p111 = scmp.ne.s32.totalorder %s100, %s101
      %p112 = scmp.eq.s32.totalorder %s24, 0
      %p113 = por %p111, %p112
      %p114 = scmp.ne.s32.totalorder %s100, %s101
      %p115 = scmp.eq.s32.totalorder %s25, 1
      %p116 = por %p114, %p115
      %p118 = scmp.ne.s32.totalorder %s101, %s117
      %p119 = scmp.eq.s32.totalorder %s25, 0
      %p120 = por %p118, %p119
      %s121 = ssub.s32 %s26, %s38
      %p122 = scmp.eq.s32.totalorder %s121, 0
      %s124 = sadd.s32 %s123, 1
      %s125 = scalar_select %p122, %s123, %s124
      %p128 = pneg %p122
      %p129 = scmp.eq.s32.totalorder %s19, 1
      %p130 = por %p128, %p129
      %p131 = scmp.ne.s32.totalorder %s123, %s126
      %p132 = scmp.eq.s32.totalorder %s19, 0
      %p133 = por %p131, %p132
      %p134 = scmp.ne.s32.totalorder %s123, %s126
      %p135 = scmp.eq.s32.totalorder %s24, 1
      %p136 = por %p134, %p135
      %p137 = scmp.ne.s32.totalorder %s126, %s127
      %p138 = scmp.eq.s32.totalorder %s24, 0
      %p139 = por %p137, %p138
      %p140 = scmp.ne.s32.totalorder %s126, %s127
      %p141 = scmp.eq.s32.totalorder %s25, 1
      %p142 = por %p140, %p141
      %p144 = scmp.ne.s32.totalorder %s127, %s143
      %p145 = scmp.eq.s32.totalorder %s25, 0
      %p146 = por %p144, %p145
      %s147 = ssub.s32 %s26, %s38
      %p148 = scmp.eq.s32.totalorder %s147, 0
      %s150 = sadd.s32 %s149, 1
      %s151 = scalar_select %p148, %s149, %s150
      %p154 = pneg %p148
      %p155 = scmp.eq.s32.totalorder %s19, 1
      %p156 = por %p154, %p155
      %p157 = scmp.ne.s32.totalorder %s149, %s152
      %p158 = scmp.eq.s32.totalorder %s19, 0
      %p159 = por %p157, %p158
      %p160 = scmp.ne.s32.totalorder %s149, %s152
      %p161 = scmp.eq.s32.totalorder %s24, 1
      %p162 = por %p160, %p161
      %p163 = scmp.ne.s32.totalorder %s152, %s153
      %p164 = scmp.eq.s32.totalorder %s24, 0
      %p165 = por %p163, %p164
      %p166 = scmp.ne.s32.totalorder %s152, %s153
      %p167 = scmp.eq.s32.totalorder %s25, 1
      %p168 = por %p166, %p167
      %p170 = scmp.ne.s32.totalorder %s153, %s169
      %p171 = scmp.eq.s32.totalorder %s25, 0
      %p172 = por %p170, %p171
      %s173 = ssub.s32 %s26, %s38
      %p174 = scmp.eq.s32.totalorder %s173, 0
      %s176 = sadd.s32 %s175, 1
      %s177 = scalar_select %p174, %s175, %s176
      %p180 = pneg %p174
      %p181 = scmp.eq.s32.totalorder %s19, 1
      %p182 = por %p180, %p181
      %p183 = scmp.ne.s32.totalorder %s175, %s178
      %p184 = scmp.eq.s32.totalorder %s19, 0
      %p185 = por %p183, %p184
      %p186 = scmp.ne.s32.totalorder %s175, %s178
      %p187 = scmp.eq.s32.totalorder %s24, 1
      %p188 = por %p186, %p187
      %p189 = scmp.ne.s32.totalorder %s178, %s179
      %p190 = scmp.eq.s32.totalorder %s24, 0
      %p191 = por %p189, %p190
      %p192 = scmp.ne.s32.totalorder %s178, %s179
      %p193 = scmp.eq.s32.totalorder %s25, 1
      %p194 = por %p192, %p193
      %p196 = scmp.ne.s32.totalorder %s179, %s195
      %p197 = scmp.eq.s32.totalorder %s25, 0
      %p198 = por %p196, %p197
      %s199 = ssub.s32 %s26, %s38
      %p200 = scmp.eq.s32.totalorder %s199, 0
      %s202 = sadd.s32 %s201, 1
      %s203 = scalar_select %p200, %s201, %s202
      %p206 = pneg %p200
      %p207 = scmp.eq.s32.totalorder %s19, 1
      %p208 = por %p206, %p207
      %p209 = scmp.ne.s32.totalorder %s201, %s204
      %p210 = scmp.eq.s32.totalorder %s19, 0
      %p211 = por %p209, %p210
      %p212 = scmp.ne.s32.totalorder %s201, %s204
      %p213 = scmp.eq.s32.totalorder %s24, 1
      %p214 = por %p212, %p213
      %p215 = scmp.ne.s32.totalorder %s204, %s205
      %p216 = scmp.eq.s32.totalorder %s24, 0
      %p217 = por %p215, %p216
      %p218 = scmp.ne.s32.totalorder %s204, %s205
      %p219 = scmp.eq.s32.totalorder %s25, 1
      %p220 = por %p218, %p219
      %p222 = scmp.ne.s32.totalorder %s205, %s221
      %p223 = scmp.eq.s32.totalorder %s25, 0
      %p224 = por %p222, %p223
      %s225 = ssub.s32 %s26, %s38
      %p226 = scmp.eq.s32.totalorder %s225, 0
      %s228 = sadd.s32 %s227, 1
      %s229 = scalar_select %p226, %s227, %s228
      %p232 = pneg %p226
      %p233 = scmp.eq.s32.totalorder %s19, 1
      %p234 = por %p232, %p233
      %p235 = scmp.ne.s32.totalorder %s227, %s230
      %p236 = scmp.eq.s32.totalorder %s19, 0
      %p237 = por %p235, %p236
      %p238 = scmp.ne.s32.totalorder %s227, %s230
      %p239 = scmp.eq.s32.totalorder %s24, 1
      %p240 = por %p238, %p239
      %p241 = scmp.ne.s32.totalorder %s230, %s231
      %p242 = scmp.eq.s32.totalorder %s24, 0
      %p243 = por %p241, %p242
      %p244 = scmp.ne.s32.totalorder %s230, %s231
      %p245 = scmp.eq.s32.totalorder %s25, 1
      %p246 = por %p244, %p245
      %p248 = scmp.ne.s32.totalorder %s231, %s247
      %p249 = scmp.eq.s32.totalorder %s25, 0
      %p250 = por %p248, %p249
      %s251 = ssub.s32 %s26, %s38
      %p252 = scmp.eq.s32.totalorder %s251, 0
      %s254 = sadd.s32 %s253, 1
      %s255 = scalar_select %p252, %s253, %s254
      %p258 = pneg %p252
      %p259 = scmp.eq.s32.totalorder %s19, 1
      %p260 = por %p258, %p259
      %p261 = scmp.ne.s32.totalorder %s253, %s256
      %p262 = scmp.eq.s32.totalorder %s19, 0
      %p263 = por %p261, %p262
      %p264 = scmp.ne.s32.totalorder %s253, %s256
      %p265 = scmp.eq.s32.totalorder %s24, 1
      %p266 = por %p264, %p265
      %p267 = scmp.ne.s32.totalorder %s256, %s257
      %p268 = scmp.eq.s32.totalorder %s24, 0
      %p269 = por %p267, %p268
      %p270 = scmp.ne.s32.totalorder %s256, %s257
      %p271 = scmp.eq.s32.totalorder %s25, 1
      %p272 = por %p270, %p271
      %p274 = scmp.ne.s32.totalorder %s257, %s273
      %p275 = scmp.eq.s32.totalorder %s25, 0
      %p276 = por %p274, %p275
      %s277 = ssub.s32 %s26, %s38
      %p278 = scmp.eq.s32.totalorder %s277, 0
      %s280 = sadd.s32 %s279, 1
      %s281 = scalar_select %p278, %s279, %s280
      %p284 = pneg %p278
      %p285 = scmp.eq.s32.totalorder %s19, 1
      %p286 = por %p284, %p285
      %p287 = scmp.ne.s32.totalorder %s279, %s282
      %p288 = scmp.eq.s32.totalorder %s19, 0
      %p289 = por %p287, %p288
      %p290 = scmp.ne.s32.totalorder %s279, %s282
      %p291 = scmp.eq.s32.totalorder %s24, 1
      %p292 = por %p290, %p291
      %p293 = scmp.ne.s32.totalorder %s282, %s283
      %p294 = scmp.eq.s32.totalorder %s24, 0
      %p295 = por %p293, %p294
      %p296 = scmp.ne.s32.totalorder %s282, %s283
      %p297 = scmp.eq.s32.totalorder %s25, 1
      %p298 = por %p296, %p297
      %p300 = scmp.ne.s32.totalorder %s283, %s299
      %p301 = scmp.eq.s32.totalorder %s25, 0
      %p302 = por %p300, %p301
      %s303 = ssub.s32 %s26, %s38
      %s304 = ssub.s32 %s27, %s34
      %s305 = sor.u32 %s303, %s304
      %p306 = scmp.eq.s32.totalorder %s305, 0
      %s308 = sadd.s32 %s307, 1
      %s309 = scalar_select %p306, %s307, %s308
      %p312 = pneg %p306
      %p313 = scmp.eq.s32.totalorder %s19, 1
      %p314 = por %p312, %p313
      %p315 = scmp.ne.s32.totalorder %s307, %s310
      %p316 = scmp.eq.s32.totalorder %s19, 0
      %p317 = por %p315, %p316
      %p318 = scmp.ne.s32.totalorder %s307, %s310
      %p319 = scmp.eq.s32.totalorder %s24, 1
      %p320 = por %p318, %p319
      %p321 = scmp.ne.s32.totalorder %s310, %s311
      %p322 = scmp.eq.s32.totalorder %s24, 0
      %p323 = por %p321, %p322
      %p324 = scmp.ne.s32.totalorder %s310, %s311
      %p325 = scmp.eq.s32.totalorder %s25, 1
      %p326 = por %p324, %p325
      %p328 = scmp.ne.s32.totalorder %s311, %s327
      %p329 = scmp.eq.s32.totalorder %s25, 0
      %p330 = por %p328, %p329
      %p331 = scmp.le.s32.totalorder 1, %s19
      %p332 = scmp.lt.s32.totalorder %s19, 3
      %p333 = pnand %p331, %p332
      %p334 = pneg %p333
      // Predicated region
      $region9: #{tpu_custom_call.1} parent=5 // pred_check
        _
      $region10: #{tpu_custom_call.1} parent=5 // pred_check_branch
        %336 = sbr.rel (%p333) target = $region12
      $region11: #{tpu_custom_call.1} parent=5 // pred_region
        %s337 = ssub.s32 %s19, 1
      $region12: #{tpu_custom_call.1} parent=5 // pred_fallthru
        _
      %p338 = scmp.lt.s32.totalorder %s19, 2
      // Predicated region
      $region13: #{tpu_custom_call.1} parent=5 // pred_check
        %p339 = pneg %p338
      $region14: #{tpu_custom_call.1} parent=5 // pred_check_branch
        %341 = sbr.rel (%p339) target = $region16
      $region15: #{tpu_custom_call.1} parent=5 // pred_region
        // Predicated region
        $region17: #{tpu_custom_call.1} parent=15 // pred_check
          %p342 = pneg %p53
        $region18: #{tpu_custom_call.1} parent=15 // pred_check_branch
          %344 = sbr.rel (%p342) target = $region20
        $region19: #{tpu_custom_call.1} parent=15 // pred_region
          %s345 = smul.u32 32, %s27
          %p346 = scmp.lt.s32.totalorder %s26, 1
          %s347 = scalar_select %p346, %s26, 1
          %p348 = scmp.lt.s32.totalorder %s345, 31
          %s349 = scalar_select %p348, %s345, 31
          %s350 = smul.addr %s347, 32
          %s351 = sadd.s32 %s349, %s350
          %s352 = smul.addr %s351, 8
          %s353 = scalar_lea.vmem %s0, %s352
          %s354 = smul.u32 32, %s27
        $region20: #{tpu_custom_call.1} parent=15 // pred_fallthru
          _
        // Predicated region
        $region21: #{tpu_custom_call.1} parent=15 // pred_check
          %p355 = pneg %p81
        $region22: #{tpu_custom_call.1} parent=15 // pred_check_branch
          %357 = sbr.rel (%p355) target = $region24
        $region23: #{tpu_custom_call.1} parent=15 // pred_region
          %s358 = smul.u32 32, %s27
          %p359 = scmp.lt.s32.totalorder %s26, 1
          %s360 = scalar_select %p359, %s26, 1
          %p361 = scmp.lt.s32.totalorder %s358, 31
          %s362 = scalar_select %p361, %s358, 31
          %s363 = smul.addr %s360, 32
          %s364 = sadd.s32 %s362, %s363
          %s365 = smul.addr %s364, 8
          %s366 = scalar_lea.vmem %s1, %s365
          %s367 = smul.u32 32, %s27
        $region24: #{tpu_custom_call.1} parent=15 // pred_fallthru
          _
        // Predicated region
        $region25: #{tpu_custom_call.1} parent=15 // pred_check
          %p368 = pneg %p107
        $region26: #{tpu_custom_call.1} parent=15 // pred_check_branch
          %370 = sbr.rel (%p368) target = $region28
        $region27: #{tpu_custom_call.1} parent=15 // pred_region
          %p371 = scmp.lt.s32.totalorder %s26, 1
          %s372 = scalar_select %p371, %s26, 1
          %s373 = smul.addr %s372, 2
          %s374 = smul.addr %s373, 4
          %s375 = scalar_lea.vmem %s2, %s374
        $region28: #{tpu_custom_call.1} parent=15 // pred_fallthru
          _
        // Predicated region
        $region29: #{tpu_custom_call.1} parent=15 // pred_check
          %p376 = pneg %p133
        $region30: #{tpu_custom_call.1} parent=15 // pred_check_branch
          %378 = sbr.rel (%p376) target = $region32
        $region31: #{tpu_custom_call.1} parent=15 // pred_region
          %p379 = scmp.lt.s32.totalorder %s26, 1
          %s380 = scalar_select %p379, %s26, 1
          %s381 = scalar_lea.vmem %s3, %s380
        $region32: #{tpu_custom_call.1} parent=15 // pred_fallthru
          _
        // Predicated region
        $region33: #{tpu_custom_call.1} parent=15 // pred_check
          %p382 = pneg %p159
        $region34: #{tpu_custom_call.1} parent=15 // pred_check_branch
          %384 = sbr.rel (%p382) target = $region36
        $region35: #{tpu_custom_call.1} parent=15 // pred_region
          %p385 = scmp.lt.s32.totalorder %s26, 1
          %s386 = scalar_select %p385, %s26, 1
          %s387 = smul.addr %s386, 32
          %s388 = smul.addr %s387, 4
          %s389 = scalar_lea.vmem %s4, %s388
        $region36: #{tpu_custom_call.1} parent=15 // pred_fallthru
          _
        // Predicated region
        $region37: #{tpu_custom_call.1} parent=15 // pred_check
          %p390 = pneg %p185
        $region38: #{tpu_custom_call.1} parent=15 // pred_check_branch
          %392 = sbr.rel (%p390) target = $region40
        $region39: #{tpu_custom_call.1} parent=15 // pred_region
          %p393 = scmp.lt.s32.totalorder %s26, 1
          %s394 = scalar_select %p393, %s26, 1
          %s395 = smul.addr %s394, 2
          %s396 = scalar_lea.vmem %s5, %s395
        $region40: #{tpu_custom_call.1} parent=15 // pred_fallthru
          _
        // Predicated region
        $region41: #{tpu_custom_call.1} parent=15 // pred_check
          %p397 = pneg %p211
        $region42: #{tpu_custom_call.1} parent=15 // pred_check_branch
          %399 = sbr.rel (%p397) target = $region44
        $region43: #{tpu_custom_call.1} parent=15 // pred_region
          %p400 = scmp.lt.s32.totalorder %s26, 1
          %s401 = scalar_select %p400, %s26, 1
          %s402 = smul.addr %s401, 2
          %s403 = smul.addr %s402, 4
          %s404 = scalar_lea.vmem %s6, %s403
        $region44: #{tpu_custom_call.1} parent=15 // pred_fallthru
          _
        // Predicated region
        $region45: #{tpu_custom_call.1} parent=15 // pred_check
          %p405 = pneg %p237
        $region46: #{tpu_custom_call.1} parent=15 // pred_check_branch
          %407 = sbr.rel (%p405) target = $region48
        $region47: #{tpu_custom_call.1} parent=15 // pred_region
          %p408 = scmp.lt.s32.totalorder %s26, 1
          %s409 = scalar_select %p408, %s26, 1
          %s410 = scalar_lea.vmem %s7, %s409
        $region48: #{tpu_custom_call.1} parent=15 // pred_fallthru
          _
        // Predicated region
        $region49: #{tpu_custom_call.1} parent=15 // pred_check
          %p411 = pneg %p263
        $region50: #{tpu_custom_call.1} parent=15 // pred_check_branch
          %413 = sbr.rel (%p411) target = $region52
        $region51: #{tpu_custom_call.1} parent=15 // pred_region
          %p414 = scmp.lt.s32.totalorder %s26, 1
          %s415 = scalar_select %p414, %s26, 1
          %s416 = smul.addr %s415, 16
          %s417 = smul.addr %s416, 4
          %s418 = scalar_lea.vmem %s8, %s417
        $region52: #{tpu_custom_call.1} parent=15 // pred_fallthru
          _
        // Predicated region
        $region53: #{tpu_custom_call.1} parent=15 // pred_check
          %p419 = pneg %p289
        $region54: #{tpu_custom_call.1} parent=15 // pred_check_branch
          %421 = sbr.rel (%p419) target = $region56
        $region55: #{tpu_custom_call.1} parent=15 // pred_region
          %p422 = scmp.lt.s32.totalorder %s26, 1
          %s423 = scalar_select %p422, %s26, 1
          %s424 = scalar_lea.vmem %s9, %s423
        $region56: #{tpu_custom_call.1} parent=15 // pred_fallthru
          _
      $region16: #{tpu_custom_call.1} parent=5 // pred_fallthru
        _
      %p425 = scmp.le.s32.totalorder 1, %s19
      %p426 = scmp.lt.s32.totalorder %s19, 3
      %p427 = pnand %p425, %p426
      %p428 = pneg %p427
      // Predicated region
      $region57: #{tpu_custom_call.1} parent=5 // pred_check
        _
      $region58: #{tpu_custom_call.1} parent=5 // pred_check_branch
        %430 = sbr.rel (%p427) target = $region60
      $region59: #{tpu_custom_call.1} parent=5 // pred_region
        %s431 = ssub.s32 %s19, 1
        %s432 = smul.u32 32, %s29
        %p433 = scmp.lt.s32.totalorder %s28, 1
        %s434 = scalar_select %p433, %s28, 1
        %p435 = scmp.lt.s32.totalorder %s432, 31
        %s436 = scalar_select %p435, %s432, 31
        %s437 = smul.addr %s434, 32
        %s438 = sadd.s32 %s436, %s437
        %s439 = smul.addr %s438, 8
        %s440 = scalar_lea.vmem %s0, %s439
        %p441 = pneg %p59
        %p442 = pneg %p56
        %s443 = smul.u32 32, %s29
        %p444 = scmp.lt.s32.totalorder %s28, 1
        %s445 = scalar_select %p444, %s28, 1
        %p446 = scmp.lt.s32.totalorder %s443, 31
        %s447 = scalar_select %p446, %s443, 31
        %s448 = smul.addr %s445, 32
        %s449 = sadd.s32 %s447, %s448
        %s450 = smul.addr %s449, 8
        %s451 = scalar_lea.vmem %s1, %s450
        %p452 = pneg %p87
        %p453 = pneg %p84
        %p454 = scmp.lt.s32.totalorder %s28, 1
        %s455 = scalar_select %p454, %s28, 1
        %s456 = smul.addr %s455, 2
        %s457 = smul.addr %s456, 4
        %s458 = scalar_lea.vmem %s2, %s457
        %p459 = pneg %p113
        %p460 = pneg %p110
        %p461 = scmp.lt.s32.totalorder %s28, 1
        %s462 = scalar_select %p461, %s28, 1
        %s463 = scalar_lea.vmem %s3, %s462
        %p464 = pneg %p139
        %p465 = pneg %p136
        %p466 = scmp.lt.s32.totalorder %s28, 1
        %s467 = scalar_select %p466, %s28, 1
        %s468 = smul.addr %s467, 32
        %s469 = smul.addr %s468, 4
        %s470 = scalar_lea.vmem %s4, %s469
        %p471 = pneg %p165
        %p472 = pneg %p162
        %p473 = scmp.lt.s32.totalorder %s28, 1
        %s474 = scalar_select %p473, %s28, 1
        %s475 = smul.addr %s474, 2
        %s476 = scalar_lea.vmem %s5, %s475
        %p477 = pneg %p191
        %p478 = pneg %p188
        %p479 = scmp.lt.s32.totalorder %s28, 1
        %s480 = scalar_select %p479, %s28, 1
        %s481 = smul.addr %s480, 2
        %s482 = smul.addr %s481, 4
        %s483 = scalar_lea.vmem %s6, %s482
        %p484 = pneg %p217
        %p485 = pneg %p214
        %p486 = scmp.lt.s32.totalorder %s28, 1
        %s487 = scalar_select %p486, %s28, 1
        %s488 = scalar_lea.vmem %s7, %s487
        %p489 = pneg %p243
        %p490 = pneg %p240
        %p491 = scmp.lt.s32.totalorder %s28, 1
        %s492 = scalar_select %p491, %s28, 1
        %s493 = smul.addr %s492, 16
        %s494 = smul.addr %s493, 4
        %s495 = scalar_lea.vmem %s8, %s494
        %p496 = pneg %p269
        %p497 = pneg %p266
        %p498 = scmp.lt.s32.totalorder %s28, 1
        %s499 = scalar_select %p498, %s28, 1
        %s500 = scalar_lea.vmem %s9, %s499
        %p501 = pneg %p295
        %p502 = pneg %p292
        %p503 = pneg %p323
        %p504 = pneg %p320
        %s505 = sand.u32 %s310, 1
        %s506 = scalar_lea.sflag [#allocation3], %s505
        %s507 = sand.u32 %s310, 1
        %s508 = smul.addr %s507, 128
        %s509 = scalar_lea.vmem [#allocation2], %s508
        %s510 = smul.u32 32, %s29
        %p511 = scmp.lt.s32.totalorder %s28, 1
        %s512 = scalar_select %p511, %s28, 1
        %p513 = scmp.lt.s32.totalorder %s510, 31
        %s514 = scalar_select %p513, %s510, 31
        %s515 = smul.addr %s512, 32
        %s516 = sadd.s32 %s514, %s515
        %s517 = smul.addr %s516, 8
        %s518 = scalar_lea.vmem %s0, %s517
        %s519 = smul.u32 32, %s29
        %s520 = smul.u32 32, %s29
        %p521 = scmp.lt.s32.totalorder %s28, 1
        %s522 = scalar_select %p521, %s28, 1
        %p523 = scmp.lt.s32.totalorder %s520, 31
        %s524 = scalar_select %p523, %s520, 31
        %s525 = smul.addr %s522, 32
        %s526 = sadd.s32 %s524, %s525
        %s527 = smul.addr %s526, 8
        %s528 = scalar_lea.vmem %s1, %s527
        %s529 = smul.u32 32, %s29
        %p530 = scmp.lt.s32.totalorder %s28, 1
        %s531 = scalar_select %p530, %s28, 1
        %s532 = smul.addr %s531, 2
        %s533 = smul.addr %s532, 4
        %s534 = scalar_lea.vmem %s2, %s533
        %p535 = scmp.lt.s32.totalorder %s28, 1
        %s536 = scalar_select %p535, %s28, 1
        %s537 = scalar_lea.vmem %s3, %s536
        %p538 = scmp.lt.s32.totalorder %s28, 1
        %s539 = scalar_select %p538, %s28, 1
        %s540 = smul.addr %s539, 32
        %s541 = smul.addr %s540, 4
        %s542 = scalar_lea.vmem %s4, %s541
        %p543 = scmp.lt.s32.totalorder %s28, 1
        %s544 = scalar_select %p543, %s28, 1
        %s545 = smul.addr %s544, 2
        %s546 = scalar_lea.vmem %s5, %s545
        %p547 = scmp.lt.s32.totalorder %s28, 1
        %s548 = scalar_select %p547, %s28, 1
        %s549 = smul.addr %s548, 2
        %s550 = smul.addr %s549, 4
        %s551 = scalar_lea.vmem %s6, %s550
        %p552 = scmp.lt.s32.totalorder %s28, 1
        %s553 = scalar_select %p552, %s28, 1
        %s554 = scalar_lea.vmem %s7, %s553
        %p555 = scmp.lt.s32.totalorder %s28, 1
        %s556 = scalar_select %p555, %s28, 1
        %s557 = smul.addr %s556, 16
        %s558 = smul.addr %s557, 4
        %s559 = scalar_lea.vmem %s8, %s558
        %p560 = scmp.lt.s32.totalorder %s28, 1
        %s561 = scalar_select %p560, %s28, 1
        %s562 = scalar_lea.vmem %s9, %s561
        %s563 = smul.u32 32, %s29
        %v565 = vld [vmem:[%s518] sm:$0xff]
        %v566 = vld [vmem:[%s518 + $0x8] sm:$0xff]
        %v567 = vld [vmem:[%s518 + $0x10] sm:$0xff]
        %v568 = vld [vmem:[%s518 + $0x18] sm:$0xff]
        %v569 = vld [vmem:[%s518 + $0x20] sm:$0xff]
        %v570 = vld [vmem:[%s518 + $0x28] sm:$0xff]
        %v571 = vld [vmem:[%s518 + $0x30] sm:$0xff]
        %v572 = vld [vmem:[%s518 + $0x38] sm:$0xff]
        %v573 = vld [vmem:[%s518 + $0x40] sm:$0xff]
        %v574 = vld [vmem:[%s518 + $0x48] sm:$0xff]
        %v575 = vld [vmem:[%s518 + $0x50] sm:$0xff]
        %v576 = vld [vmem:[%s518 + $0x58] sm:$0xff]
        %v577 = vld [vmem:[%s518 + $0x60] sm:$0xff]
        %v578 = vld [vmem:[%s518 + $0x68] sm:$0xff]
        %v579 = vld [vmem:[%s518 + $0x70] sm:$0xff]
        %v580 = vld [vmem:[%s518 + $0x78] sm:$0xff]
        %v581 = vld [vmem:[%s518 + $0x80] sm:$0xff]
        %v582 = vld [vmem:[%s518 + $0x88] sm:$0xff]
        %v583 = vld [vmem:[%s518 + $0x90] sm:$0xff]
        %v584 = vld [vmem:[%s518 + $0x98] sm:$0xff]
        %v585 = vld [vmem:[%s518 + $0xa0] sm:$0xff]
        %v586 = vld [vmem:[%s518 + $0xa8] sm:$0xff]
        %v587 = vld [vmem:[%s518 + $0xb0] sm:$0xff]
        %v588 = vld [vmem:[%s518 + $0xb8] sm:$0xff]
        %v589 = vld [vmem:[%s518 + $0xc0] sm:$0xff]
        %v590 = vld [vmem:[%s518 + $0xc8] sm:$0xff]
        %v591 = vld [vmem:[%s518 + $0xd0] sm:$0xff]
        %v592 = vld [vmem:[%s518 + $0xd8] sm:$0xff]
        %v593 = vld [vmem:[%s518 + $0xe0] sm:$0xff]
        %v594 = vld [vmem:[%s518 + $0xe8] sm:$0xff]
        %v595 = vld [vmem:[%s518 + $0xf0] sm:$0xff]
        %v596 = vld [vmem:[%s518 + $0xf8] sm:$0xff]
        %v597 = vpack.c.bf16 %v566, %v565
        %v598 = vpack.c.bf16 %v568, %v567
        %v599 = vpack.c.bf16 %v570, %v569
        %v600 = vpack.c.bf16 %v572, %v571
        %v601 = vpack.c.bf16 %v574, %v573
        %v602 = vpack.c.bf16 %v576, %v575
        %v603 = vpack.c.bf16 %v578, %v577
        %v604 = vpack.c.bf16 %v580, %v579
        %v605 = vpack.c.bf16 %v582, %v581
        %v606 = vpack.c.bf16 %v584, %v583
        %v607 = vpack.c.bf16 %v586, %v585
        %v608 = vpack.c.bf16 %v588, %v587
        %v609 = vpack.c.bf16 %v590, %v589
        %v610 = vpack.c.bf16 %v592, %v591
        %v611 = vpack.c.bf16 %v594, %v593
        %v612 = vpack.c.bf16 %v596, %v595
        %v613 = vld [vmem:[%s534] sm:$0xf]
        %v614 = vld [vmem:[%s534 + $0x4] sm:$0xf]
        %v615 = vld [vmem:[%s537] sm:$0x1]
        %v617 = vlaneseq
        %v618 = vshrl.u32 %v617, 7
        %v619 = vsub.s32 0, %v618
        %v620 = vrot.slane %v615, %v619
        %v624 = vunpack.c.l.b16 %v613
        %v625 = vunpack.c.l.b16 %v614
        %v626 = vpack.c.b16 %v625, %v624
        %vm628 = vcmask 130048
        %v630 = vsel %vm628, %v597, 0
        %v633 = vsel %vm628, %v598, 0
        %v636 = vsel %vm628, %v599, 0
        %v639 = vsel %vm628, %v600, 0
        %v642 = vsel %vm628, %v601, 0
        %v645 = vsel %vm628, %v602, 0
        %v648 = vsel %vm628, %v603, 0
        %v651 = vsel %vm628, %v604, 0
        %v654 = vsel %vm628, %v605, 0
        %v657 = vsel %vm628, %v606, 0
        %v660 = vsel %vm628, %v607, 0
        %v663 = vsel %vm628, %v608, 0
        %v666 = vsel %vm628, %v609, 0
        %v669 = vsel %vm628, %v610, 0
        %v672 = vsel %vm628, %v611, 0
        %v675 = vsel %vm628, %v612, 0
        %677 = vmatprep.subr.bf16.mxu0 0
        %678 = vmatpush1.bf16.msra.mxu0 %v626
        %679 = vmatprep.subr.bf16.mxu0 0
        %680 = vmatpush1.bf16.msra.mxu0 0
        %681 = vmatprep.subr.bf16.mxu0 0
        %682 = vmatpush1.bf16.msra.mxu0 0
        %683 = vmatprep.subr.bf16.mxu0 0
        %684 = vmatpush1.bf16.msra.mxu0 0
        %685 = vmatprep.subr.bf16.mxu0 0
        %686 = vmatpush1.bf16.msra.mxu0 0
        %687 = vmatprep.subr.bf16.mxu0 0
        %688 = vmatpush1.bf16.msra.mxu0 0
        %689 = vmatprep.subr.bf16.mxu0 0
        %690 = vmatpush1.bf16.msra.mxu0 0
        %691 = vmatprep.subr.bf16.mxu0 0
        %692 = vmatpush1.bf16.msra.mxu0 0
        %693 = vmatprep.subr.bf16.mxu0 0
        %694 = vmatpush1.bf16.msra.mxu0 0
        %695 = vmatprep.subr.bf16.mxu0 0
        %696 = vmatpush1.bf16.msra.mxu0 0
        %697 = vmatprep.subr.bf16.mxu0 0
        %698 = vmatpush1.bf16.msra.mxu0 0
        %699 = vmatprep.subr.bf16.mxu0 0
        %700 = vmatpush1.bf16.msra.mxu0 0
        %701 = vmatprep.subr.bf16.mxu0 0
        %702 = vmatpush1.bf16.msra.mxu0 0
        %703 = vmatprep.subr.bf16.mxu0 0
        %704 = vmatpush1.bf16.msra.mxu0 0
        %705 = vmatprep.subr.bf16.mxu0 0
        %706 = vmatpush1.bf16.msra.mxu0 0
        %707 = vmatprep.subr.bf16.mxu0 0
        %708 = vmatpush1.bf16.msra.mxu0 0
        %709 = vmatprep.mubr.bf16.mxu0 0
        %710 = vmatmul.mubr.bf16.gmra.mrb[0].mxu0 %v630
        %v711 = vpop.f32.mrb[0].mxu0
        %v712 = vadd.f32 %v620, %v711
        %v713 = vpop.f32.mrb[0].mxu0
        %v714 = vpop.f32.mrb[0].mxu0
        %v715 = vadd.f32 %v620, %v714
        %v716 = vpop.f32.mrb[0].mxu0
        %717 = vmatprep.mubr.bf16.mxu0 0
        %718 = vmatmul.mubr.bf16.gmra.mrb[0].mxu0 %v633
        %v719 = vpop.f32.mrb[0].mxu0
        %v720 = vadd.f32 %v620, %v719
        %v721 = vpop.f32.mrb[0].mxu0
        %v722 = vpop.f32.mrb[0].mxu0
        %v723 = vadd.f32 %v620, %v722
        %v724 = vpop.f32.mrb[0].mxu0
        %725 = vmatprep.mubr.bf16.mxu0 0
        %726 = vmatmul.mubr.bf16.gmra.mrb[0].mxu0 %v636
        %v727 = vpop.f32.mrb[0].mxu0
        %v728 = vadd.f32 %v620, %v727
        %v729 = vpop.f32.mrb[0].mxu0
        %v730 = vpop.f32.mrb[0].mxu0
        %v731 = vadd.f32 %v620, %v730
        %v732 = vpop.f32.mrb[0].mxu0
        %733 = vmatprep.mubr.bf16.mxu0 0
        %734 = vmatmul.mubr.bf16.gmra.mrb[0].mxu0 %v639
        %v735 = vpop.f32.mrb[0].mxu0
        %v736 = vadd.f32 %v620, %v735
        %v737 = vpop.f32.mrb[0].mxu0
        %v738 = vpop.f32.mrb[0].mxu0
        %v739 = vadd.f32 %v620, %v738
        %v740 = vpop.f32.mrb[0].mxu0
        %741 = vmatprep.mubr.bf16.mxu0 0
        %742 = vmatmul.mubr.bf16.gmra.mrb[0].mxu0 %v642
        %v743 = vpop.f32.mrb[0].mxu0
        %v744 = vadd.f32 %v620, %v743
        %v745 = vpop.f32.mrb[0].mxu0
        %v746 = vpop.f32.mrb[0].mxu0
        %v747 = vadd.f32 %v620, %v746
        %v748 = vpop.f32.mrb[0].mxu0
        %749 = vmatprep.mubr.bf16.mxu0 0
        %750 = vmatmul.mubr.bf16.gmra.mrb[0].mxu0 %v645
        %v751 = vpop.f32.mrb[0].mxu0
        %v752 = vadd.f32 %v620, %v751
        %v753 = vpop.f32.mrb[0].mxu0
        %v754 = vpop.f32.mrb[0].mxu0
        %v755 = vadd.f32 %v620, %v754
        %v756 = vpop.f32.mrb[0].mxu0
        %757 = vmatprep.mubr.bf16.mxu0 0
        %758 = vmatmul.mubr.bf16.gmra.mrb[0].mxu0 %v648
        %v759 = vpop.f32.mrb[0].mxu0
        %v760 = vadd.f32 %v620, %v759
        %v761 = vpop.f32.mrb[0].mxu0
        %v762 = vpop.f32.mrb[0].mxu0
        %v763 = vadd.f32 %v620, %v762
        %v764 = vpop.f32.mrb[0].mxu0
        %765 = vmatprep.mubr.bf16.mxu0 0
        %766 = vmatmul.mubr.bf16.gmra.mrb[0].mxu0 %v651
        %v767 = vpop.f32.mrb[0].mxu0
        %v768 = vadd.f32 %v620, %v767
        %v769 = vpop.f32.mrb[0].mxu0
        %v770 = vpop.f32.mrb[0].mxu0
        %v771 = vadd.f32 %v620, %v770
        %v772 = vpop.f32.mrb[0].mxu0
        %773 = vmatprep.mubr.bf16.mxu0 0
        %774 = vmatmul.mubr.bf16.gmra.mrb[0].mxu0 %v654
        %v775 = vpop.f32.mrb[0].mxu0
        %v776 = vadd.f32 %v620, %v775
        %v777 = vpop.f32.mrb[0].mxu0
        %v778 = vpop.f32.mrb[0].mxu0
        %v779 = vadd.f32 %v620, %v778
        %v780 = vpop.f32.mrb[0].mxu0
        %781 = vmatprep.mubr.bf16.mxu0 0
        %782 = vmatmul.mubr.bf16.gmra.mrb[0].mxu0 %v657
        %v783 = vpop.f32.mrb[0].mxu0
        %v784 = vadd.f32 %v620, %v783
        %v785 = vpop.f32.mrb[0].mxu0
        %v786 = vpop.f32.mrb[0].mxu0
        %v787 = vadd.f32 %v620, %v786
        %v788 = vpop.f32.mrb[0].mxu0
        %789 = vmatprep.mubr.bf16.mxu0 0
        %790 = vmatmul.mubr.bf16.gmra.mrb[0].mxu0 %v660
        %v791 = vpop.f32.mrb[0].mxu0
        %v792 = vadd.f32 %v620, %v791
        %v793 = vpop.f32.mrb[0].mxu0
        %v794 = vpop.f32.mrb[0].mxu0
        %v795 = vadd.f32 %v620, %v794
        %v796 = vpop.f32.mrb[0].mxu0
        %797 = vmatprep.mubr.bf16.mxu0 0
        %798 = vmatmul.mubr.bf16.gmra.mrb[0].mxu0 %v663
        %v799 = vpop.f32.mrb[0].mxu0
        %v800 = vadd.f32 %v620, %v799
        %v801 = vpop.f32.mrb[0].mxu0
        %v802 = vpop.f32.mrb[0].mxu0
        %v803 = vadd.f32 %v620, %v802
        %v804 = vpop.f32.mrb[0].mxu0
        %805 = vmatprep.mubr.bf16.mxu0 0
        %806 = vmatmul.mubr.bf16.gmra.mrb[0].mxu0 %v666
        %v807 = vpop.f32.mrb[0].mxu0
        %v808 = vadd.f32 %v620, %v807
        %v809 = vpop.f32.mrb[0].mxu0
        %v810 = vpop.f32.mrb[0].mxu0
        %v811 = vadd.f32 %v620, %v810
        %v812 = vpop.f32.mrb[0].mxu0
        %813 = vmatprep.mubr.bf16.mxu0 0
        %814 = vmatmul.mubr.bf16.gmra.mrb[0].mxu0 %v669
        %v815 = vpop.f32.mrb[0].mxu0
        %v816 = vadd.f32 %v620, %v815
        %v817 = vpop.f32.mrb[0].mxu0
        %v818 = vpop.f32.mrb[0].mxu0
        %v819 = vadd.f32 %v620, %v818
        %v820 = vpop.f32.mrb[0].mxu0
        %821 = vmatprep.mubr.bf16.mxu0 0
        %822 = vmatmul.mubr.bf16.gmra.mrb[0].mxu0 %v672
        %v823 = vpop.f32.mrb[0].mxu0
        %v824 = vadd.f32 %v620, %v823
        %v825 = vpop.f32.mrb[0].mxu0
        %v826 = vpop.f32.mrb[0].mxu0
        %v827 = vadd.f32 %v620, %v826
        %v828 = vpop.f32.mrb[0].mxu0
        %829 = vmatprep.mubr.bf16.mxu0 0
        %830 = vmatmul.mubr.bf16.gmra.mrb[0].mxu0 %v675
        %v831 = vpop.f32.mrb[0].mxu0
        %v832 = vadd.f32 %v620, %v831
        %v833 = vpop.f32.mrb[0].mxu0
        %v834 = vpop.f32.mrb[0].mxu0
        %v835 = vadd.f32 %v620, %v834
        %v836 = vpop.f32.mrb[0].mxu0
        %837 = vdwg.mxu0
        %v838 = vmax.f32 %v712, 0.0
        %v839 = vmax.f32 %v715, 0.0
        %v840 = vmax.f32 %v720, 0.0
        %v841 = vmax.f32 %v723, 0.0
        %v842 = vmax.f32 %v728, 0.0
        %v843 = vmax.f32 %v731, 0.0
        %v844 = vmax.f32 %v736, 0.0
        %v845 = vmax.f32 %v739, 0.0
        %v846 = vmax.f32 %v744, 0.0
        %v847 = vmax.f32 %v747, 0.0
        %v848 = vmax.f32 %v752, 0.0
        %v849 = vmax.f32 %v755, 0.0
        %v850 = vmax.f32 %v760, 0.0
        %v851 = vmax.f32 %v763, 0.0
        %v852 = vmax.f32 %v768, 0.0
        %v853 = vmax.f32 %v771, 0.0
        %v854 = vmax.f32 %v776, 0.0
        %v855 = vmax.f32 %v779, 0.0
        %v856 = vmax.f32 %v784, 0.0
        %v857 = vmax.f32 %v787, 0.0
        %v858 = vmax.f32 %v792, 0.0
        %v859 = vmax.f32 %v795, 0.0
        %v860 = vmax.f32 %v800, 0.0
        %v861 = vmax.f32 %v803, 0.0
        %v862 = vmax.f32 %v808, 0.0
        %v863 = vmax.f32 %v811, 0.0
        %v864 = vmax.f32 %v816, 0.0
        %v865 = vmax.f32 %v819, 0.0
        %v866 = vmax.f32 %v824, 0.0
        %v867 = vmax.f32 %v827, 0.0
        %v868 = vmax.f32 %v832, 0.0
        %v869 = vmax.f32 %v835, 0.0
        %v870 = vpack.c.bf16 %v839, %v838
        %v871 = vpack.c.bf16 %v841, %v840
        %v872 = vpack.c.bf16 %v843, %v842
        %v873 = vpack.c.bf16 %v845, %v844
        %v874 = vpack.c.bf16 %v847, %v846
        %v875 = vpack.c.bf16 %v849, %v848
        %v876 = vpack.c.bf16 %v851, %v850
        %v877 = vpack.c.bf16 %v853, %v852
        %v878 = vpack.c.bf16 %v855, %v854
        %v879 = vpack.c.bf16 %v857, %v856
        %v880 = vpack.c.bf16 %v859, %v858
        %v881 = vpack.c.bf16 %v861, %v860
        %v882 = vpack.c.bf16 %v863, %v862
        %v883 = vpack.c.bf16 %v865, %v864
        %v884 = vpack.c.bf16 %v867, %v866
        %v885 = vpack.c.bf16 %v869, %v868
        %v886 = vld [vmem:[%s542] sm:$0xff]
        %v887 = vld [vmem:[%s542 + $0x8] sm:$0xff]
        %v888 = vld [vmem:[%s542 + $0x10] sm:$0xff]
        %v889 = vld [vmem:[%s542 + $0x18] sm:$0xff]
        %v890 = vld [vmem:[%s542 + $0x20] sm:$0xff]
        %v891 = vld [vmem:[%s542 + $0x28] sm:$0xff]
        %v892 = vld [vmem:[%s542 + $0x30] sm:$0xff]
        %v893 = vld [vmem:[%s542 + $0x38] sm:$0xff]
        %v894 = vld [vmem:[%s542 + $0x40] sm:$0xff]
        %v895 = vld [vmem:[%s542 + $0x48] sm:$0xff]
        %v896 = vld [vmem:[%s542 + $0x50] sm:$0xff]
        %v897 = vld [vmem:[%s542 + $0x58] sm:$0xff]
        %v898 = vld [vmem:[%s542 + $0x60] sm:$0xff]
        %v899 = vld [vmem:[%s542 + $0x68] sm:$0xff]
        %v900 = vld [vmem:[%s542 + $0x70] sm:$0xff]
        %v901 = vld [vmem:[%s542 + $0x78] sm:$0xff]
        %v902 = vld [vmem:[%s546] sm:$0x3]
        %v904 = vlaneseq
        %v905 = vshrl.u32 %v904, 7
        %v906 = vsub.s32 0, %v905
        %v907 = vrot.slane %v902, %v906
        %v908 = vlaneseq
        %v909 = vshrl.u32 %v908, 7
        %v910 = vsub.s32 1, %v909
        %v911 = vrot.slane %v902, %v910
        %v930 = vunpack.c.l.b16 %v886
        %v931 = vunpack.c.h.b16 %v886
        %v932 = vunpack.c.l.b16 %v887
        %v933 = vunpack.c.h.b16 %v887
        %v934 = vunpack.c.l.b16 %v888
        %v935 = vunpack.c.h.b16 %v888
        %v936 = vunpack.c.l.b16 %v889
        %v937 = vunpack.c.h.b16 %v889
        %v938 = vunpack.c.l.b16 %v890
        %v939 = vunpack.c.h.b16 %v890
        %v940 = vunpack.c.l.b16 %v891
        %v941 = vunpack.c.h.b16 %v891
        %v942 = vunpack.c.l.b16 %v892
        %v943 = vunpack.c.h.b16 %v892
        %v944 = vunpack.c.l.b16 %v893
        %v945 = vunpack.c.h.b16 %v893
        %v946 = vunpack.c.l.b16 %v894
        %v947 = vunpack.c.h.b16 %v894
        %v948 = vunpack.c.l.b16 %v895
        %v949 = vunpack.c.h.b16 %v895
        %v950 = vunpack.c.l.b16 %v896
        %v951 = vunpack.c.h.b16 %v896
        %v952 = vunpack.c.l.b16 %v897
        %v953 = vunpack.c.h.b16 %v897
        %v954 = vunpack.c.l.b16 %v898
        %v955 = vunpack.c.h.b16 %v898
        %v956 = vunpack.c.l.b16 %v899
        %v957 = vunpack.c.h.b16 %v899
        %v958 = vunpack.c.l.b16 %v900
        %v959 = vunpack.c.h.b16 %v900
        %v960 = vunpack.c.l.b16 %v901
        %v961 = vunpack.c.h.b16 %v901
        %v962 = vpack.c.b16 %v932, %v930
        %v963 = vpack.c.b16 %v933, %v931
        %v964 = vpack.c.b16 %v936, %v934
        %v965 = vpack.c.b16 %v937, %v935
        %v966 = vpack.c.b16 %v940, %v938
        %v967 = vpack.c.b16 %v941, %v939
        %v968 = vpack.c.b16 %v944, %v942
        %v969 = vpack.c.b16 %v945, %v943
        %v970 = vpack.c.b16 %v948, %v946
        %v971 = vpack.c.b16 %v949, %v947
        %v972 = vpack.c.b16 %v952, %v950
        %v973 = vpack.c.b16 %v953, %v951
        %v974 = vpack.c.b16 %v956, %v954
        %v975 = vpack.c.b16 %v957, %v955
        %v976 = vpack.c.b16 %v960, %v958
        %v977 = vpack.c.b16 %v961, %v959
        %994 = vmatprep.subr.bf16.mxu0 %v963
        %995 = vmatpush1.bf16.msra.mxu0 %v962
        %996 = vmatprep.subr.bf16.mxu0 %v965
        %997 = vmatpush1.bf16.msra.mxu0 %v964
        %998 = vmatprep.subr.bf16.mxu0 %v967
        %999 = vmatpush1.bf16.msra.mxu0 %v966
        %1000 = vmatprep.subr.bf16.mxu0 %v969
        %1001 = vmatpush1.bf16.msra.mxu0 %v968
        %1002 = vmatprep.subr.bf16.mxu0 %v971
        %1003 = vmatpush1.bf16.msra.mxu0 %v970
        %1004 = vmatprep.subr.bf16.mxu0 %v973
        %1005 = vmatpush1.bf16.msra.mxu0 %v972
        %1006 = vmatprep.subr.bf16.mxu0 %v975
        %1007 = vmatpush1.bf16.msra.mxu0 %v974
        %1008 = vmatprep.subr.bf16.mxu0 %v977
        %1009 = vmatpush1.bf16.msra.mxu0 %v976
        %1010 = vmatprep.subr.bf16.mxu0 0
        %1011 = vmatpush1.bf16.msra.mxu0 0
        %1012 = vmatprep.subr.bf16.mxu0 0
        %1013 = vmatpush1.bf16.msra.mxu0 0
        %1014 = vmatprep.subr.bf16.mxu0 0
        %1015 = vmatpush1.bf16.msra.mxu0 0
        %1016 = vmatprep.subr.bf16.mxu0 0
        %1017 = vmatpush1.bf16.msra.mxu0 0
        %1018 = vmatprep.subr.bf16.mxu0 0
        %1019 = vmatpush1.bf16.msra.mxu0 0
        %1020 = vmatprep.subr.bf16.mxu0 0
        %1021 = vmatpush1.bf16.msra.mxu0 0
        %1022 = vmatprep.subr.bf16.mxu0 0
        %1023 = vmatpush1.bf16.msra.mxu0 0
        %1024 = vmatprep.subr.bf16.mxu0 0
        %1025 = vmatpush1.bf16.msra.mxu0 0
        %1026 = vmatprep.mubr.bf16.mxu0 0
        %1027 = vmatmul.mubr.bf16.gmra.mrb[0].mxu0 %v870
        %v1028 = vpop.f32.mrb[0].mxu0
        %v1029 = vadd.f32 %v907, %v1028
        %v1030 = vpop.f32.mrb[0].mxu0
        %v1031 = vadd.f32 %v911, %v1030
        %v1032 = vpop.f32.mrb[0].mxu0
        %v1033 = vadd.f32 %v907, %v1032
        %v1034 = vpop.f32.mrb[0].mxu0
        %v1035 = vadd.f32 %v911, %v1034
        %1036 = vmatprep.mubr.bf16.mxu0 0
        %1037 = vmatmul.mubr.bf16.gmra.mrb[0].mxu0 %v871
        %v1038 = vpop.f32.mrb[0].mxu0
        %v1039 = vadd.f32 %v907, %v1038
        %v1040 = vpop.f32.mrb[0].mxu0
        %v1041 = vadd.f32 %v911, %v1040
        %v1042 = vpop.f32.mrb[0].mxu0
        %v1043 = vadd.f32 %v907, %v1042
        %v1044 = vpop.f32.mrb[0].mxu0
        %v1045 = vadd.f32 %v911, %v1044
        %1046 = vmatprep.mubr.bf16.mxu0 0
        %1047 = vmatmul.mubr.bf16.gmra.mrb[0].mxu0 %v872
        %v1048 = vpop.f32.mrb[0].mxu0
        %v1049 = vadd.f32 %v907, %v1048
        %v1050 = vpop.f32.mrb[0].mxu0
        %v1051 = vadd.f32 %v911, %v1050
        %v1052 = vpop.f32.mrb[0].mxu0
        %v1053 = vadd.f32 %v907, %v1052
        %v1054 = vpop.f32.mrb[0].mxu0
        %v1055 = vadd.f32 %v911, %v1054
        %1056 = vmatprep.mubr.bf16.mxu0 0
        %1057 = vmatmul.mubr.bf16.gmra.mrb[0].mxu0 %v873
        %v1058 = vpop.f32.mrb[0].mxu0
        %v1059 = vadd.f32 %v907, %v1058
        %v1060 = vpop.f32.mrb[0].mxu0
        %v1061 = vadd.f32 %v911, %v1060
        %v1062 = vpop.f32.mrb[0].mxu0
        %v1063 = vadd.f32 %v907, %v1062
        %v1064 = vpop.f32.mrb[0].mxu0
        %v1065 = vadd.f32 %v911, %v1064
        %1066 = vmatprep.mubr.bf16.mxu0 0
        %1067 = vmatmul.mubr.bf16.gmra.mrb[0].mxu0 %v874
        %v1068 = vpop.f32.mrb[0].mxu0
        %v1069 = vadd.f32 %v907, %v1068
        %v1070 = vpop.f32.mrb[0].mxu0
        %v1071 = vadd.f32 %v911, %v1070
        %v1072 = vpop.f32.mrb[0].mxu0
        %v1073 = vadd.f32 %v907, %v1072
        %v1074 = vpop.f32.mrb[0].mxu0
        %v1075 = vadd.f32 %v911, %v1074
        %1076 = vmatprep.mubr.bf16.mxu0 0
        %1077 = vmatmul.mubr.bf16.gmra.mrb[0].mxu0 %v875
        %v1078 = vpop.f32.mrb[0].mxu0
        %v1079 = vadd.f32 %v907, %v1078
        %v1080 = vpop.f32.mrb[0].mxu0
        %v1081 = vadd.f32 %v911, %v1080
        %v1082 = vpop.f32.mrb[0].mxu0
        %v1083 = vadd.f32 %v907, %v1082
        %v1084 = vpop.f32.mrb[0].mxu0
        %v1085 = vadd.f32 %v911, %v1084
        %1086 = vmatprep.mubr.bf16.mxu0 0
        %1087 = vmatmul.mubr.bf16.gmra.mrb[0].mxu0 %v876
        %v1088 = vpop.f32.mrb[0].mxu0
        %v1089 = vadd.f32 %v907, %v1088
        %v1090 = vpop.f32.mrb[0].mxu0
        %v1091 = vadd.f32 %v911, %v1090
        %v1092 = vpop.f32.mrb[0].mxu0
        %v1093 = vadd.f32 %v907, %v1092
        %v1094 = vpop.f32.mrb[0].mxu0
        %v1095 = vadd.f32 %v911, %v1094
        %1096 = vmatprep.mubr.bf16.mxu0 0
        %1097 = vmatmul.mubr.bf16.gmra.mrb[0].mxu0 %v877
        %v1098 = vpop.f32.mrb[0].mxu0
        %v1099 = vadd.f32 %v907, %v1098
        %v1100 = vpop.f32.mrb[0].mxu0
        %v1101 = vadd.f32 %v911, %v1100
        %v1102 = vpop.f32.mrb[0].mxu0
        %v1103 = vadd.f32 %v907, %v1102
        %v1104 = vpop.f32.mrb[0].mxu0
        %v1105 = vadd.f32 %v911, %v1104
        %1106 = vmatprep.mubr.bf16.mxu0 0
        %1107 = vmatmul.mubr.bf16.gmra.mrb[0].mxu0 %v878
        %v1108 = vpop.f32.mrb[0].mxu0
        %v1109 = vadd.f32 %v907, %v1108
        %v1110 = vpop.f32.mrb[0].mxu0
        %v1111 = vadd.f32 %v911, %v1110
        %v1112 = vpop.f32.mrb[0].mxu0
        %v1113 = vadd.f32 %v907, %v1112
        %v1114 = vpop.f32.mrb[0].mxu0
        %v1115 = vadd.f32 %v911, %v1114
        %1116 = vmatprep.mubr.bf16.mxu0 0
        %1117 = vmatmul.mubr.bf16.gmra.mrb[0].mxu0 %v879
        %v1118 = vpop.f32.mrb[0].mxu0
        %v1119 = vadd.f32 %v907, %v1118
        %v1120 = vpop.f32.mrb[0].mxu0
        %v1121 = vadd.f32 %v911, %v1120
        %v1122 = vpop.f32.mrb[0].mxu0
        %v1123 = vadd.f32 %v907, %v1122
        %v1124 = vpop.f32.mrb[0].mxu0
        %v1125 = vadd.f32 %v911, %v1124
        %1126 = vmatprep.mubr.bf16.mxu0 0
        %1127 = vmatmul.mubr.bf16.gmra.mrb[0].mxu0 %v880
        %v1128 = vpop.f32.mrb[0].mxu0
        %v1129 = vadd.f32 %v907, %v1128
        %v1130 = vpop.f32.mrb[0].mxu0
        %v1131 = vadd.f32 %v911, %v1130
        %v1132 = vpop.f32.mrb[0].mxu0
        %v1133 = vadd.f32 %v907, %v1132
        %v1134 = vpop.f32.mrb[0].mxu0
        %v1135 = vadd.f32 %v911, %v1134
        %1136 = vmatprep.mubr.bf16.mxu0 0
        %1137 = vmatmul.mubr.bf16.gmra.mrb[0].mxu0 %v881
        %v1138 = vpop.f32.mrb[0].mxu0
        %v1139 = vadd.f32 %v907, %v1138
        %v1140 = vpop.f32.mrb[0].mxu0
        %v1141 = vadd.f32 %v911, %v1140
        %v1142 = vpop.f32.mrb[0].mxu0
        %v1143 = vadd.f32 %v907, %v1142
        %v1144 = vpop.f32.mrb[0].mxu0
        %v1145 = vadd.f32 %v911, %v1144
        %1146 = vmatprep.mubr.bf16.mxu0 0
        %1147 = vmatmul.mubr.bf16.gmra.mrb[0].mxu0 %v882
        %v1148 = vpop.f32.mrb[0].mxu0
        %v1149 = vadd.f32 %v907, %v1148
        %v1150 = vpop.f32.mrb[0].mxu0
        %v1151 = vadd.f32 %v911, %v1150
        %v1152 = vpop.f32.mrb[0].mxu0
        %v1153 = vadd.f32 %v907, %v1152
        %v1154 = vpop.f32.mrb[0].mxu0
        %v1155 = vadd.f32 %v911, %v1154
        %1156 = vmatprep.mubr.bf16.mxu0 0
        %1157 = vmatmul.mubr.bf16.gmra.mrb[0].mxu0 %v883
        %v1158 = vpop.f32.mrb[0].mxu0
        %v1159 = vadd.f32 %v907, %v1158
        %v1160 = vpop.f32.mrb[0].mxu0
        %v1161 = vadd.f32 %v911, %v1160
        %v1162 = vpop.f32.mrb[0].mxu0
        %v1163 = vadd.f32 %v907, %v1162
        %v1164 = vpop.f32.mrb[0].mxu0
        %v1165 = vadd.f32 %v911, %v1164
        %1166 = vmatprep.mubr.bf16.mxu0 0
        %1167 = vmatmul.mubr.bf16.gmra.mrb[0].mxu0 %v884
        %v1168 = vpop.f32.mrb[0].mxu0
        %v1169 = vadd.f32 %v907, %v1168
        %v1170 = vpop.f32.mrb[0].mxu0
        %v1171 = vadd.f32 %v911, %v1170
        %v1172 = vpop.f32.mrb[0].mxu0
        %v1173 = vadd.f32 %v907, %v1172
        %v1174 = vpop.f32.mrb[0].mxu0
        %v1175 = vadd.f32 %v911, %v1174
        %1176 = vmatprep.mubr.bf16.mxu0 0
        %1177 = vmatmul.mubr.bf16.gmra.mrb[0].mxu0 %v885
        %v1178 = vpop.f32.mrb[0].mxu0
        %v1179 = vadd.f32 %v907, %v1178
        %v1180 = vpop.f32.mrb[0].mxu0
        %v1181 = vadd.f32 %v911, %v1180
        %v1182 = vpop.f32.mrb[0].mxu0
        %v1183 = vadd.f32 %v907, %v1182
        %v1184 = vpop.f32.mrb[0].mxu0
        %v1185 = vadd.f32 %v911, %v1184
        %1186 = vdwg.mxu0
        %v1187 = vld [vmem:[%s528] sm:$0xff]
        %v1188 = vld [vmem:[%s528 + $0x8] sm:$0xff]
        %v1189 = vld [vmem:[%s528 + $0x10] sm:$0xff]
        %v1190 = vld [vmem:[%s528 + $0x18] sm:$0xff]
        %v1191 = vld [vmem:[%s528 + $0x20] sm:$0xff]
        %v1192 = vld [vmem:[%s528 + $0x28] sm:$0xff]
        %v1193 = vld [vmem:[%s528 + $0x30] sm:$0xff]
        %v1194 = vld [vmem:[%s528 + $0x38] sm:$0xff]
        %v1195 = vld [vmem:[%s528 + $0x40] sm:$0xff]
        %v1196 = vld [vmem:[%s528 + $0x48] sm:$0xff]
        %v1197 = vld [vmem:[%s528 + $0x50] sm:$0xff]
        %v1198 = vld [vmem:[%s528 + $0x58] sm:$0xff]
        %v1199 = vld [vmem:[%s528 + $0x60] sm:$0xff]
        %v1200 = vld [vmem:[%s528 + $0x68] sm:$0xff]
        %v1201 = vld [vmem:[%s528 + $0x70] sm:$0xff]
        %v1202 = vld [vmem:[%s528 + $0x78] sm:$0xff]
        %v1203 = vld [vmem:[%s528 + $0x80] sm:$0xff]
        %v1204 = vld [vmem:[%s528 + $0x88] sm:$0xff]
        %v1205 = vld [vmem:[%s528 + $0x90] sm:$0xff]
        %v1206 = vld [vmem:[%s528 + $0x98] sm:$0xff]
        %v1207 = vld [vmem:[%s528 + $0xa0] sm:$0xff]
        %v1208 = vld [vmem:[%s528 + $0xa8] sm:$0xff]
        %v1209 = vld [vmem:[%s528 + $0xb0] sm:$0xff]
        %v1210 = vld [vmem:[%s528 + $0xb8] sm:$0xff]
        %v1211 = vld [vmem:[%s528 + $0xc0] sm:$0xff]
        %v1212 = vld [vmem:[%s528 + $0xc8] sm:$0xff]
        %v1213 = vld [vmem:[%s528 + $0xd0] sm:$0xff]
        %v1214 = vld [vmem:[%s528 + $0xd8] sm:$0xff]
        %v1215 = vld [vmem:[%s528 + $0xe0] sm:$0xff]
        %v1216 = vld [vmem:[%s528 + $0xe8] sm:$0xff]
        %v1217 = vld [vmem:[%s528 + $0xf0] sm:$0xff]
        %v1218 = vld [vmem:[%s528 + $0xf8] sm:$0xff]
        %v1219 = vmul.f32 %v1031, 0.5
        %v1220 = vmul.f32 %v1035, 0.5
        %v1221 = vmul.f32 %v1041, 0.5
        %v1222 = vmul.f32 %v1045, 0.5
        %v1223 = vmul.f32 %v1051, 0.5
        %v1224 = vmul.f32 %v1055, 0.5
        %v1225 = vmul.f32 %v1061, 0.5
        %v1226 = vmul.f32 %v1065, 0.5
        %v1227 = vmul.f32 %v1071, 0.5
        %v1228 = vmul.f32 %v1075, 0.5
        %v1229 = vmul.f32 %v1081, 0.5
        %v1230 = vmul.f32 %v1085, 0.5
        %v1231 = vmul.f32 %v1091, 0.5
        %v1232 = vmul.f32 %v1095, 0.5
        %v1233 = vmul.f32 %v1101, 0.5
        %v1234 = vmul.f32 %v1105, 0.5
        %v1235 = vmul.f32 %v1111, 0.5
        %v1236 = vmul.f32 %v1115, 0.5
        %v1237 = vmul.f32 %v1121, 0.5
        %v1238 = vmul.f32 %v1125, 0.5
        %v1239 = vmul.f32 %v1131, 0.5
        %v1240 = vmul.f32 %v1135, 0.5
        %v1241 = vmul.f32 %v1141, 0.5
        %v1242 = vmul.f32 %v1145, 0.5
        %v1243 = vmul.f32 %v1151, 0.5
        %v1244 = vmul.f32 %v1155, 0.5
        %v1245 = vmul.f32 %v1161, 0.5
        %v1246 = vmul.f32 %v1165, 0.5
        %v1247 = vmul.f32 %v1171, 0.5
        %v1248 = vmul.f32 %v1175, 0.5
        %v1249 = vmul.f32 %v1181, 0.5
        %v1250 = vmul.f32 %v1185, 0.5
        %v1251 = vmul.f32 %v1219, 1.442695
        %v1252 = vpow.pop %v1251
        %v1253 = vmul.f32 %v1220, 1.442695
        %v1254 = vpow.pop %v1253
        %v1255 = vmul.f32 %v1221, 1.442695
        %v1256 = vpow.pop %v1255
        %v1257 = vmul.f32 %v1222, 1.442695
        %v1258 = vpow.pop %v1257
        %v1259 = vmul.f32 %v1223, 1.442695
        %v1260 = vpow.pop %v1259
        %v1261 = vmul.f32 %v1224, 1.442695
        %v1262 = vpow.pop %v1261
        %v1263 = vmul.f32 %v1225, 1.442695
        %v1264 = vpow.pop %v1263
        %v1265 = vmul.f32 %v1226, 1.442695
        %v1266 = vpow.pop %v1265
        %v1267 = vmul.f32 %v1227, 1.442695
        %v1268 = vpow.pop %v1267
        %v1269 = vmul.f32 %v1228, 1.442695
        %v1270 = vpow.pop %v1269
        %v1271 = vmul.f32 %v1229, 1.442695
        %v1272 = vpow.pop %v1271
        %v1273 = vmul.f32 %v1230, 1.442695
        %v1274 = vpow.pop %v1273
        %v1275 = vmul.f32 %v1231, 1.442695
        %v1276 = vpow.pop %v1275
        %v1277 = vmul.f32 %v1232, 1.442695
        %v1278 = vpow.pop %v1277
        %v1279 = vmul.f32 %v1233, 1.442695
        %v1280 = vpow.pop %v1279
        %v1281 = vmul.f32 %v1234, 1.442695
        %v1282 = vpow.pop %v1281
        %v1283 = vmul.f32 %v1235, 1.442695
        %v1284 = vpow.pop %v1283
        %v1285 = vmul.f32 %v1236, 1.442695
        %v1286 = vpow.pop %v1285
        %v1287 = vmul.f32 %v1237, 1.442695
        %v1288 = vpow.pop %v1287
        %v1289 = vmul.f32 %v1238, 1.442695
        %v1290 = vpow.pop %v1289
        %v1291 = vmul.f32 %v1239, 1.442695
        %v1292 = vpow.pop %v1291
        %v1293 = vmul.f32 %v1240, 1.442695
        %v1294 = vpow.pop %v1293
        %v1295 = vmul.f32 %v1241, 1.442695
        %v1296 = vpow.pop %v1295
        %v1297 = vmul.f32 %v1242, 1.442695
        %v1298 = vpow.pop %v1297
        %v1299 = vmul.f32 %v1243, 1.442695
        %v1300 = vpow.pop %v1299
        %v1301 = vmul.f32 %v1244, 1.442695
        %v1302 = vpow.pop %v1301
        %v1303 = vmul.f32 %v1245, 1.442695
        %v1304 = vpow.pop %v1303
        %v1305 = vmul.f32 %v1246, 1.442695
        %v1306 = vpow.pop %v1305
        %v1307 = vmul.f32 %v1247, 1.442695
        %v1308 = vpow.pop %v1307
        %v1309 = vmul.f32 %v1248, 1.442695
        %v1310 = vpow.pop %v1309
        %v1311 = vmul.f32 %v1249, 1.442695
        %v1312 = vpow.pop %v1311
        %v1313 = vmul.f32 %v1250, 1.442695
        %v1314 = vpow.pop %v1313
        %v1315 = vmul.f32 %v1187, %v1252
        %v1316 = vmul.f32 %v1188, %v1254
        %v1317 = vmul.f32 %v1189, %v1256
        %v1318 = vmul.f32 %v1190, %v1258
        %v1319 = vmul.f32 %v1191, %v1260
        %v1320 = vmul.f32 %v1192, %v1262
        %v1321 = vmul.f32 %v1193, %v1264
        %v1322 = vmul.f32 %v1194, %v1266
        %v1323 = vmul.f32 %v1195, %v1268
        %v1324 = vmul.f32 %v1196, %v1270
        %v1325 = vmul.f32 %v1197, %v1272
        %v1326 = vmul.f32 %v1198, %v1274
        %v1327 = vmul.f32 %v1199, %v1276
        %v1328 = vmul.f32 %v1200, %v1278
        %v1329 = vmul.f32 %v1201, %v1280
        %v1330 = vmul.f32 %v1202, %v1282
        %v1331 = vmul.f32 %v1203, %v1284
        %v1332 = vmul.f32 %v1204, %v1286
        %v1333 = vmul.f32 %v1205, %v1288
        %v1334 = vmul.f32 %v1206, %v1290
        %v1335 = vmul.f32 %v1207, %v1292
        %v1336 = vmul.f32 %v1208, %v1294
        %v1337 = vmul.f32 %v1209, %v1296
        %v1338 = vmul.f32 %v1210, %v1298
        %v1339 = vmul.f32 %v1211, %v1300
        %v1340 = vmul.f32 %v1212, %v1302
        %v1341 = vmul.f32 %v1213, %v1304
        %v1342 = vmul.f32 %v1214, %v1306
        %v1343 = vmul.f32 %v1215, %v1308
        %v1344 = vmul.f32 %v1216, %v1310
        %v1345 = vmul.f32 %v1217, %v1312
        %v1346 = vmul.f32 %v1218, %v1314
        %v1347 = vadd.f32 %v1029, %v1315
        %v1348 = vadd.f32 %v1033, %v1316
        %v1349 = vadd.f32 %v1039, %v1317
        %v1350 = vadd.f32 %v1043, %v1318
        %v1351 = vadd.f32 %v1049, %v1319
        %v1352 = vadd.f32 %v1053, %v1320
        %v1353 = vadd.f32 %v1059, %v1321
        %v1354 = vadd.f32 %v1063, %v1322
        %v1355 = vadd.f32 %v1069, %v1323
        %v1356 = vadd.f32 %v1073, %v1324
        %v1357 = vadd.f32 %v1079, %v1325
        %v1358 = vadd.f32 %v1083, %v1326
        %v1359 = vadd.f32 %v1089, %v1327
        %v1360 = vadd.f32 %v1093, %v1328
        %v1361 = vadd.f32 %v1099, %v1329
        %v1362 = vadd.f32 %v1103, %v1330
        %v1363 = vadd.f32 %v1109, %v1331
        %v1364 = vadd.f32 %v1113, %v1332
        %v1365 = vadd.f32 %v1119, %v1333
        %v1366 = vadd.f32 %v1123, %v1334
        %v1367 = vadd.f32 %v1129, %v1335
        %v1368 = vadd.f32 %v1133, %v1336
        %v1369 = vadd.f32 %v1139, %v1337
        %v1370 = vadd.f32 %v1143, %v1338
        %v1371 = vadd.f32 %v1149, %v1339
        %v1372 = vadd.f32 %v1153, %v1340
        %v1373 = vadd.f32 %v1159, %v1341
        %v1374 = vadd.f32 %v1163, %v1342
        %v1375 = vadd.f32 %v1169, %v1343
        %v1376 = vadd.f32 %v1173, %v1344
        %v1377 = vadd.f32 %v1179, %v1345
        %v1378 = vadd.f32 %v1183, %v1346
        %v1379 = vpack.c.bf16 %v1348, %v1347
        %v1380 = vpack.c.bf16 %v1350, %v1349
        %v1381 = vpack.c.bf16 %v1352, %v1351
        %v1382 = vpack.c.bf16 %v1354, %v1353
        %v1383 = vpack.c.bf16 %v1356, %v1355
        %v1384 = vpack.c.bf16 %v1358, %v1357
        %v1385 = vpack.c.bf16 %v1360, %v1359
        %v1386 = vpack.c.bf16 %v1362, %v1361
        %v1387 = vpack.c.bf16 %v1364, %v1363
        %v1388 = vpack.c.bf16 %v1366, %v1365
        %v1389 = vpack.c.bf16 %v1368, %v1367
        %v1390 = vpack.c.bf16 %v1370, %v1369
        %v1391 = vpack.c.bf16 %v1372, %v1371
        %v1392 = vpack.c.bf16 %v1374, %v1373
        %v1393 = vpack.c.bf16 %v1376, %v1375
        %v1394 = vpack.c.bf16 %v1378, %v1377
        %v1395 = vld [vmem:[%s551] sm:$0xf]
        %v1396 = vld [vmem:[%s551 + $0x4] sm:$0xf]
        %v1397 = vld [vmem:[%s554] sm:$0x1]
        %v1399 = vlaneseq
        %v1400 = vshrl.u32 %v1399, 7
        %v1401 = vsub.s32 0, %v1400
        %v1402 = vrot.slane %v1397, %v1401
        %v1406 = vunpack.c.l.b16 %v1395
        %v1407 = vunpack.c.l.b16 %v1396
        %v1408 = vpack.c.b16 %v1407, %v1406
        %v1411 = vsel %vm628, %v1379, 0
        %v1414 = vsel %vm628, %v1380, 0
        %v1417 = vsel %vm628, %v1381, 0
        %v1420 = vsel %vm628, %v1382, 0
        %v1423 = vsel %vm628, %v1383, 0
        %v1426 = vsel %vm628, %v1384, 0
        %v1429 = vsel %vm628, %v1385, 0
        %v1432 = vsel %vm628, %v1386, 0
        %v1435 = vsel %vm628, %v1387, 0
        %v1438 = vsel %vm628, %v1388, 0
        %v1441 = vsel %vm628, %v1389, 0
        %v1444 = vsel %vm628, %v1390, 0
        %v1447 = vsel %vm628, %v1391, 0
        %v1450 = vsel %vm628, %v1392, 0
        %v1453 = vsel %vm628, %v1393, 0
        %v1456 = vsel %vm628, %v1394, 0
        %1458 = vmatprep.subr.bf16.mxu0 0
        %1459 = vmatpush1.bf16.msra.mxu0 %v1408
        %1460 = vmatprep.subr.bf16.mxu0 0
        %1461 = vmatpush1.bf16.msra.mxu0 0
        %1462 = vmatprep.subr.bf16.mxu0 0
        %1463 = vmatpush1.bf16.msra.mxu0 0
        %1464 = vmatprep.subr.bf16.mxu0 0
        %1465 = vmatpush1.bf16.msra.mxu0 0
        %1466 = vmatprep.subr.bf16.mxu0 0
        %1467 = vmatpush1.bf16.msra.mxu0 0
        %1468 = vmatprep.subr.bf16.mxu0 0
        %1469 = vmatpush1.bf16.msra.mxu0 0
        %1470 = vmatprep.subr.bf16.mxu0 0
        %1471 = vmatpush1.bf16.msra.mxu0 0
        %1472 = vmatprep.subr.bf16.mxu0 0
        %1473 = vmatpush1.bf16.msra.mxu0 0
        %1474 = vmatprep.subr.bf16.mxu0 0
        %1475 = vmatpush1.bf16.msra.mxu0 0
        %1476 = vmatprep.subr.bf16.mxu0 0
        %1477 = vmatpush1.bf16.msra.mxu0 0
        %1478 = vmatprep.subr.bf16.mxu0 0
        %1479 = vmatpush1.bf16.msra.mxu0 0
        %1480 = vmatprep.subr.bf16.mxu0 0
        %1481 = vmatpush1.bf16.msra.mxu0 0
        %1482 = vmatprep.subr.bf16.mxu0 0
        %1483 = vmatpush1.bf16.msra.mxu0 0
        %1484 = vmatprep.subr.bf16.mxu0 0
        %1485 = vmatpush1.bf16.msra.mxu0 0
        %1486 = vmatprep.subr.bf16.mxu0 0
        %1487 = vmatpush1.bf16.msra.mxu0 0
        %1488 = vmatprep.subr.bf16.mxu0 0
        %1489 = vmatpush1.bf16.msra.mxu0 0
        %1490 = vmatprep.mubr.bf16.mxu0 0
        %1491 = vmatmul.mubr.bf16.gmra.mrb[0].mxu0 %v1411
        %v1492 = vpop.f32.mrb[0].mxu0
        %v1493 = vadd.f32 %v1402, %v1492
        %v1494 = vpop.f32.mrb[0].mxu0
        %v1495 = vpop.f32.mrb[0].mxu0
        %v1496 = vadd.f32 %v1402, %v1495
        %v1497 = vpop.f32.mrb[0].mxu0
        %1498 = vmatprep.mubr.bf16.mxu0 0
        %1499 = vmatmul.mubr.bf16.gmra.mrb[0].mxu0 %v1414
        %v1500 = vpop.f32.mrb[0].mxu0
        %v1501 = vadd.f32 %v1402, %v1500
        %v1502 = vpop.f32.mrb[0].mxu0
        %v1503 = vpop.f32.mrb[0].mxu0
        %v1504 = vadd.f32 %v1402, %v1503
        %v1505 = vpop.f32.mrb[0].mxu0
        %1506 = vmatprep.mubr.bf16.mxu0 0
        %1507 = vmatmul.mubr.bf16.gmra.mrb[0].mxu0 %v1417
        %v1508 = vpop.f32.mrb[0].mxu0
        %v1509 = vadd.f32 %v1402, %v1508
        %v1510 = vpop.f32.mrb[0].mxu0
        %v1511 = vpop.f32.mrb[0].mxu0
        %v1512 = vadd.f32 %v1402, %v1511
        %v1513 = vpop.f32.mrb[0].mxu0
        %1514 = vmatprep.mubr.bf16.mxu0 0
        %1515 = vmatmul.mubr.bf16.gmra.mrb[0].mxu0 %v1420
        %v1516 = vpop.f32.mrb[0].mxu0
        %v1517 = vadd.f32 %v1402, %v1516
        %v1518 = vpop.f32.mrb[0].mxu0
        %v1519 = vpop.f32.mrb[0].mxu0
        %v1520 = vadd.f32 %v1402, %v1519
        %v1521 = vpop.f32.mrb[0].mxu0
        %1522 = vmatprep.mubr.bf16.mxu0 0
        %1523 = vmatmul.mubr.bf16.gmra.mrb[0].mxu0 %v1423
        %v1524 = vpop.f32.mrb[0].mxu0
        %v1525 = vadd.f32 %v1402, %v1524
        %v1526 = vpop.f32.mrb[0].mxu0
        %v1527 = vpop.f32.mrb[0].mxu0
        %v1528 = vadd.f32 %v1402, %v1527
        %v1529 = vpop.f32.mrb[0].mxu0
        %1530 = vmatprep.mubr.bf16.mxu0 0
        %1531 = vmatmul.mubr.bf16.gmra.mrb[0].mxu0 %v1426
        %v1532 = vpop.f32.mrb[0].mxu0
        %v1533 = vadd.f32 %v1402, %v1532
        %v1534 = vpop.f32.mrb[0].mxu0
        %v1535 = vpop.f32.mrb[0].mxu0
        %v1536 = vadd.f32 %v1402, %v1535
        %v1537 = vpop.f32.mrb[0].mxu0
        %1538 = vmatprep.mubr.bf16.mxu0 0
        %1539 = vmatmul.mubr.bf16.gmra.mrb[0].mxu0 %v1429
        %v1540 = vpop.f32.mrb[0].mxu0
        %v1541 = vadd.f32 %v1402, %v1540
        %v1542 = vpop.f32.mrb[0].mxu0
        %v1543 = vpop.f32.mrb[0].mxu0
        %v1544 = vadd.f32 %v1402, %v1543
        %v1545 = vpop.f32.mrb[0].mxu0
        %1546 = vmatprep.mubr.bf16.mxu0 0
        %1547 = vmatmul.mubr.bf16.gmra.mrb[0].mxu0 %v1432
        %v1548 = vpop.f32.mrb[0].mxu0
        %v1549 = vadd.f32 %v1402, %v1548
        %v1550 = vpop.f32.mrb[0].mxu0
        %v1551 = vpop.f32.mrb[0].mxu0
        %v1552 = vadd.f32 %v1402, %v1551
        %v1553 = vpop.f32.mrb[0].mxu0
        %1554 = vmatprep.mubr.bf16.mxu0 0
        %1555 = vmatmul.mubr.bf16.gmra.mrb[0].mxu0 %v1435
        %v1556 = vpop.f32.mrb[0].mxu0
        %v1557 = vadd.f32 %v1402, %v1556
        %v1558 = vpop.f32.mrb[0].mxu0
        %v1559 = vpop.f32.mrb[0].mxu0
        %v1560 = vadd.f32 %v1402, %v1559
        %v1561 = vpop.f32.mrb[0].mxu0
        %1562 = vmatprep.mubr.bf16.mxu0 0
        %1563 = vmatmul.mubr.bf16.gmra.mrb[0].mxu0 %v1438
        %v1564 = vpop.f32.mrb[0].mxu0
        %v1565 = vadd.f32 %v1402, %v1564
        %v1566 = vpop.f32.mrb[0].mxu0
        %v1567 = vpop.f32.mrb[0].mxu0
        %v1568 = vadd.f32 %v1402, %v1567
        %v1569 = vpop.f32.mrb[0].mxu0
        %1570 = vmatprep.mubr.bf16.mxu0 0
        %1571 = vmatmul.mubr.bf16.gmra.mrb[0].mxu0 %v1441
        %v1572 = vpop.f32.mrb[0].mxu0
        %v1573 = vadd.f32 %v1402, %v1572
        %v1574 = vpop.f32.mrb[0].mxu0
        %v1575 = vpop.f32.mrb[0].mxu0
        %v1576 = vadd.f32 %v1402, %v1575
        %v1577 = vpop.f32.mrb[0].mxu0
        %1578 = vmatprep.mubr.bf16.mxu0 0
        %1579 = vmatmul.mubr.bf16.gmra.mrb[0].mxu0 %v1444
        %v1580 = vpop.f32.mrb[0].mxu0
        %v1581 = vadd.f32 %v1402, %v1580
        %v1582 = vpop.f32.mrb[0].mxu0
        %v1583 = vpop.f32.mrb[0].mxu0
        %v1584 = vadd.f32 %v1402, %v1583
        %v1585 = vpop.f32.mrb[0].mxu0
        %1586 = vmatprep.mubr.bf16.mxu0 0
        %1587 = vmatmul.mubr.bf16.gmra.mrb[0].mxu0 %v1447
        %v1588 = vpop.f32.mrb[0].mxu0
        %v1589 = vadd.f32 %v1402, %v1588
        %v1590 = vpop.f32.mrb[0].mxu0
        %v1591 = vpop.f32.mrb[0].mxu0
        %v1592 = vadd.f32 %v1402, %v1591
        %v1593 = vpop.f32.mrb[0].mxu0
        %1594 = vmatprep.mubr.bf16.mxu0 0
        %1595 = vmatmul.mubr.bf16.gmra.mrb[0].mxu0 %v1450
        %v1596 = vpop.f32.mrb[0].mxu0
        %v1597 = vadd.f32 %v1402, %v1596
        %v1598 = vpop.f32.mrb[0].mxu0
        %v1599 = vpop.f32.mrb[0].mxu0
        %v1600 = vadd.f32 %v1402, %v1599
        %v1601 = vpop.f32.mrb[0].mxu0
        %1602 = vmatprep.mubr.bf16.mxu0 0
        %1603 = vmatmul.mubr.bf16.gmra.mrb[0].mxu0 %v1453
        %v1604 = vpop.f32.mrb[0].mxu0
        %v1605 = vadd.f32 %v1402, %v1604
        %v1606 = vpop.f32.mrb[0].mxu0
        %v1607 = vpop.f32.mrb[0].mxu0
        %v1608 = vadd.f32 %v1402, %v1607
        %v1609 = vpop.f32.mrb[0].mxu0
        %1610 = vmatprep.mubr.bf16.mxu0 0
        %1611 = vmatmul.mubr.bf16.gmra.mrb[0].mxu0 %v1456
        %v1612 = vpop.f32.mrb[0].mxu0
        %v1613 = vadd.f32 %v1402, %v1612
        %v1614 = vpop.f32.mrb[0].mxu0
        %v1615 = vpop.f32.mrb[0].mxu0
        %v1616 = vadd.f32 %v1402, %v1615
        %v1617 = vpop.f32.mrb[0].mxu0
        %1618 = vdwg.mxu0
        %v1619 = vmax.f32 %v1493, 0.0
        %v1620 = vmax.f32 %v1496, 0.0
        %v1621 = vmax.f32 %v1501, 0.0
        %v1622 = vmax.f32 %v1504, 0.0
        %v1623 = vmax.f32 %v1509, 0.0
        %v1624 = vmax.f32 %v1512, 0.0
        %v1625 = vmax.f32 %v1517, 0.0
        %v1626 = vmax.f32 %v1520, 0.0
        %v1627 = vmax.f32 %v1525, 0.0
        %v1628 = vmax.f32 %v1528, 0.0
        %v1629 = vmax.f32 %v1533, 0.0
        %v1630 = vmax.f32 %v1536, 0.0
        %v1631 = vmax.f32 %v1541, 0.0
        %v1632 = vmax.f32 %v1544, 0.0
        %v1633 = vmax.f32 %v1549, 0.0
        %v1634 = vmax.f32 %v1552, 0.0
        %v1635 = vmax.f32 %v1557, 0.0
        %v1636 = vmax.f32 %v1560, 0.0
        %v1637 = vmax.f32 %v1565, 0.0
        %v1638 = vmax.f32 %v1568, 0.0
        %v1639 = vmax.f32 %v1573, 0.0
        %v1640 = vmax.f32 %v1576, 0.0
        %v1641 = vmax.f32 %v1581, 0.0
        %v1642 = vmax.f32 %v1584, 0.0
        %v1643 = vmax.f32 %v1589, 0.0
        %v1644 = vmax.f32 %v1592, 0.0
        %v1645 = vmax.f32 %v1597, 0.0
        %v1646 = vmax.f32 %v1600, 0.0
        %v1647 = vmax.f32 %v1605, 0.0
        %v1648 = vmax.f32 %v1608, 0.0
        %v1649 = vmax.f32 %v1613, 0.0
        %v1650 = vmax.f32 %v1616, 0.0
        %v1651 = vpack.c.bf16 %v1620, %v1619
        %v1652 = vpack.c.bf16 %v1622, %v1621
        %v1653 = vpack.c.bf16 %v1624, %v1623
        %v1654 = vpack.c.bf16 %v1626, %v1625
        %v1655 = vpack.c.bf16 %v1628, %v1627
        %v1656 = vpack.c.bf16 %v1630, %v1629
        %v1657 = vpack.c.bf16 %v1632, %v1631
        %v1658 = vpack.c.bf16 %v1634, %v1633
        %v1659 = vpack.c.bf16 %v1636, %v1635
        %v1660 = vpack.c.bf16 %v1638, %v1637
        %v1661 = vpack.c.bf16 %v1640, %v1639
        %v1662 = vpack.c.bf16 %v1642, %v1641
        %v1663 = vpack.c.bf16 %v1644, %v1643
        %v1664 = vpack.c.bf16 %v1646, %v1645
        %v1665 = vpack.c.bf16 %v1648, %v1647
        %v1666 = vpack.c.bf16 %v1650, %v1649
        %v1667 = vld [vmem:[%s559] sm:$0xf]
        %v1668 = vld [vmem:[%s559 + $0x4] sm:$0xf]
        %v1669 = vld [vmem:[%s559 + $0x8] sm:$0xf]
        %v1670 = vld [vmem:[%s559 + $0xc] sm:$0xf]
        %v1671 = vld [vmem:[%s559 + $0x10] sm:$0xf]
        %v1672 = vld [vmem:[%s559 + $0x14] sm:$0xf]
        %v1673 = vld [vmem:[%s559 + $0x18] sm:$0xf]
        %v1674 = vld [vmem:[%s559 + $0x1c] sm:$0xf]
        %v1675 = vld [vmem:[%s559 + $0x20] sm:$0xf]
        %v1676 = vld [vmem:[%s559 + $0x24] sm:$0xf]
        %v1677 = vld [vmem:[%s559 + $0x28] sm:$0xf]
        %v1678 = vld [vmem:[%s559 + $0x2c] sm:$0xf]
        %v1679 = vld [vmem:[%s559 + $0x30] sm:$0xf]
        %v1680 = vld [vmem:[%s559 + $0x34] sm:$0xf]
        %v1681 = vld [vmem:[%s559 + $0x38] sm:$0xf]
        %v1682 = vld [vmem:[%s559 + $0x3c] sm:$0xf]
        %v1683 = vld [vmem:[%s562] sm:$0x1]
        %v1685 = vlaneseq
        %v1686 = vshrl.u32 %v1685, 7
        %v1687 = vsub.s32 0, %v1686
        %v1688 = vrot.slane %v1683, %v1687
        %v1706 = vunpack.c.l.b16 %v1667
        %v1707 = vunpack.c.l.b16 %v1668
        %v1708 = vunpack.c.l.b16 %v1669
        %v1709 = vunpack.c.l.b16 %v1670
        %v1710 = vunpack.c.l.b16 %v1671
        %v1711 = vunpack.c.l.b16 %v1672
        %v1712 = vunpack.c.l.b16 %v1673
        %v1713 = vunpack.c.l.b16 %v1674
        %v1714 = vunpack.c.l.b16 %v1675
        %v1715 = vunpack.c.l.b16 %v1676
        %v1716 = vunpack.c.l.b16 %v1677
        %v1717 = vunpack.c.l.b16 %v1678
        %v1718 = vunpack.c.l.b16 %v1679
        %v1719 = vunpack.c.l.b16 %v1680
        %v1720 = vunpack.c.l.b16 %v1681
        %v1721 = vunpack.c.l.b16 %v1682
        %v1722 = vpack.c.b16 %v1707, %v1706
        %v1723 = vpack.c.b16 %v1709, %v1708
        %v1724 = vpack.c.b16 %v1711, %v1710
        %v1725 = vpack.c.b16 %v1713, %v1712
        %v1726 = vpack.c.b16 %v1715, %v1714
        %v1727 = vpack.c.b16 %v1717, %v1716
        %v1728 = vpack.c.b16 %v1719, %v1718
        %v1729 = vpack.c.b16 %v1721, %v1720
        %1738 = vmatprep.subr.bf16.mxu0 0
        %1739 = vmatpush1.bf16.msra.mxu0 %v1722
        %1740 = vmatprep.subr.bf16.mxu0 0
        %1741 = vmatpush1.bf16.msra.mxu0 %v1723
        %1742 = vmatprep.subr.bf16.mxu0 0
        %1743 = vmatpush1.bf16.msra.mxu0 %v1724
        %1744 = vmatprep.subr.bf16.mxu0 0
        %1745 = vmatpush1.bf16.msra.mxu0 %v1725
        %1746 = vmatprep.subr.bf16.mxu0 0
        %1747 = vmatpush1.bf16.msra.mxu0 %v1726
        %1748 = vmatprep.subr.bf16.mxu0 0
        %1749 = vmatpush1.bf16.msra.mxu0 %v1727
        %1750 = vmatprep.subr.bf16.mxu0 0
        %1751 = vmatpush1.bf16.msra.mxu0 %v1728
        %1752 = vmatprep.subr.bf16.mxu0 0
        %1753 = vmatpush1.bf16.msra.mxu0 %v1729
        %1754 = vmatprep.subr.bf16.mxu0 0
        %1755 = vmatpush1.bf16.msra.mxu0 0
        %1756 = vmatprep.subr.bf16.mxu0 0
        %1757 = vmatpush1.bf16.msra.mxu0 0
        %1758 = vmatprep.subr.bf16.mxu0 0
        %1759 = vmatpush1.bf16.msra.mxu0 0
        %1760 = vmatprep.subr.bf16.mxu0 0
        %1761 = vmatpush1.bf16.msra.mxu0 0
        %1762 = vmatprep.subr.bf16.mxu0 0
        %1763 = vmatpush1.bf16.msra.mxu0 0
        %1764 = vmatprep.subr.bf16.mxu0 0
        %1765 = vmatpush1.bf16.msra.mxu0 0
        %1766 = vmatprep.subr.bf16.mxu0 0
        %1767 = vmatpush1.bf16.msra.mxu0 0
        %1768 = vmatprep.subr.bf16.mxu0 0
        %1769 = vmatpush1.bf16.msra.mxu0 0
        %1770 = vmatprep.mubr.bf16.mxu0 0
        %1771 = vmatmul.mubr.bf16.gmra.mrb[0].mxu0 %v1651
        %v1772 = vpop.f32.mrb[0].mxu0
        %v1773 = vadd.f32 %v1688, %v1772
        %v1774 = vpop.f32.mrb[0].mxu0
        %v1775 = vpop.f32.mrb[0].mxu0
        %v1776 = vadd.f32 %v1688, %v1775
        %v1777 = vpop.f32.mrb[0].mxu0
        %1778 = vmatprep.mubr.bf16.mxu0 0
        %1779 = vmatmul.mubr.bf16.gmra.mrb[0].mxu0 %v1652
        %v1780 = vpop.f32.mrb[0].mxu0
        %v1781 = vadd.f32 %v1688, %v1780
        %v1782 = vpop.f32.mrb[0].mxu0
        %v1783 = vpop.f32.mrb[0].mxu0
        %v1784 = vadd.f32 %v1688, %v1783
        %v1785 = vpop.f32.mrb[0].mxu0
        %1786 = vmatprep.mubr.bf16.mxu0 0
        %1787 = vmatmul.mubr.bf16.gmra.mrb[0].mxu0 %v1653
        %v1788 = vpop.f32.mrb[0].mxu0
        %v1789 = vadd.f32 %v1688, %v1788
        %v1790 = vpop.f32.mrb[0].mxu0
        %v1791 = vpop.f32.mrb[0].mxu0
        %v1792 = vadd.f32 %v1688, %v1791
        %v1793 = vpop.f32.mrb[0].mxu0
        %1794 = vmatprep.mubr.bf16.mxu0 0
        %1795 = vmatmul.mubr.bf16.gmra.mrb[0].mxu0 %v1654
        %v1796 = vpop.f32.mrb[0].mxu0
        %v1797 = vadd.f32 %v1688, %v1796
        %v1798 = vpop.f32.mrb[0].mxu0
        %v1799 = vpop.f32.mrb[0].mxu0
        %v1800 = vadd.f32 %v1688, %v1799
        %v1801 = vpop.f32.mrb[0].mxu0
        %1802 = vmatprep.mubr.bf16.mxu0 0
        %1803 = vmatmul.mubr.bf16.gmra.mrb[0].mxu0 %v1655
        %v1804 = vpop.f32.mrb[0].mxu0
        %v1805 = vadd.f32 %v1688, %v1804
        %v1806 = vpop.f32.mrb[0].mxu0
        %v1807 = vpop.f32.mrb[0].mxu0
        %v1808 = vadd.f32 %v1688, %v1807
        %v1809 = vpop.f32.mrb[0].mxu0
        %1810 = vmatprep.mubr.bf16.mxu0 0
        %1811 = vmatmul.mubr.bf16.gmra.mrb[0].mxu0 %v1656
        %v1812 = vpop.f32.mrb[0].mxu0
        %v1813 = vadd.f32 %v1688, %v1812
        %v1814 = vpop.f32.mrb[0].mxu0
        %v1815 = vpop.f32.mrb[0].mxu0
        %v1816 = vadd.f32 %v1688, %v1815
        %v1817 = vpop.f32.mrb[0].mxu0
        %1818 = vmatprep.mubr.bf16.mxu0 0
        %1819 = vmatmul.mubr.bf16.gmra.mrb[0].mxu0 %v1657
        %v1820 = vpop.f32.mrb[0].mxu0
        %v1821 = vadd.f32 %v1688, %v1820
        %v1822 = vpop.f32.mrb[0].mxu0
        %v1823 = vpop.f32.mrb[0].mxu0
        %v1824 = vadd.f32 %v1688, %v1823
        %v1825 = vpop.f32.mrb[0].mxu0
        %1826 = vmatprep.mubr.bf16.mxu0 0
        %1827 = vmatmul.mubr.bf16.gmra.mrb[0].mxu0 %v1658
        %v1828 = vpop.f32.mrb[0].mxu0
        %v1829 = vadd.f32 %v1688, %v1828
        %v1830 = vpop.f32.mrb[0].mxu0
        %v1831 = vpop.f32.mrb[0].mxu0
        %v1832 = vadd.f32 %v1688, %v1831
        %v1833 = vpop.f32.mrb[0].mxu0
        %1834 = vmatprep.mubr.bf16.mxu0 0
        %1835 = vmatmul.mubr.bf16.gmra.mrb[0].mxu0 %v1659
        %v1836 = vpop.f32.mrb[0].mxu0
        %v1837 = vadd.f32 %v1688, %v1836
        %v1838 = vpop.f32.mrb[0].mxu0
        %v1839 = vpop.f32.mrb[0].mxu0
        %v1840 = vadd.f32 %v1688, %v1839
        %v1841 = vpop.f32.mrb[0].mxu0
        %1842 = vmatprep.mubr.bf16.mxu0 0
        %1843 = vmatmul.mubr.bf16.gmra.mrb[0].mxu0 %v1660
        %v1844 = vpop.f32.mrb[0].mxu0
        %v1845 = vadd.f32 %v1688, %v1844
        %v1846 = vpop.f32.mrb[0].mxu0
        %v1847 = vpop.f32.mrb[0].mxu0
        %v1848 = vadd.f32 %v1688, %v1847
        %v1849 = vpop.f32.mrb[0].mxu0
        %1850 = vmatprep.mubr.bf16.mxu0 0
        %1851 = vmatmul.mubr.bf16.gmra.mrb[0].mxu0 %v1661
        %v1852 = vpop.f32.mrb[0].mxu0
        %v1853 = vadd.f32 %v1688, %v1852
        %v1854 = vpop.f32.mrb[0].mxu0
        %v1855 = vpop.f32.mrb[0].mxu0
        %v1856 = vadd.f32 %v1688, %v1855
        %v1857 = vpop.f32.mrb[0].mxu0
        %1858 = vmatprep.mubr.bf16.mxu0 0
        %1859 = vmatmul.mubr.bf16.gmra.mrb[0].mxu0 %v1662
        %v1860 = vpop.f32.mrb[0].mxu0
        %v1861 = vadd.f32 %v1688, %v1860
        %v1862 = vpop.f32.mrb[0].mxu0
        %v1863 = vpop.f32.mrb[0].mxu0
        %v1864 = vadd.f32 %v1688, %v1863
        %v1865 = vpop.f32.mrb[0].mxu0
        %1866 = vmatprep.mubr.bf16.mxu0 0
        %1867 = vmatmul.mubr.bf16.gmra.mrb[0].mxu0 %v1663
        %v1868 = vpop.f32.mrb[0].mxu0
        %v1869 = vadd.f32 %v1688, %v1868
        %v1870 = vpop.f32.mrb[0].mxu0
        %v1871 = vpop.f32.mrb[0].mxu0
        %v1872 = vadd.f32 %v1688, %v1871
        %v1873 = vpop.f32.mrb[0].mxu0
        %1874 = vmatprep.mubr.bf16.mxu0 0
        %1875 = vmatmul.mubr.bf16.gmra.mrb[0].mxu0 %v1664
        %v1876 = vpop.f32.mrb[0].mxu0
        %v1877 = vadd.f32 %v1688, %v1876
        %v1878 = vpop.f32.mrb[0].mxu0
        %v1879 = vpop.f32.mrb[0].mxu0
        %v1880 = vadd.f32 %v1688, %v1879
        %v1881 = vpop.f32.mrb[0].mxu0
        %1882 = vmatprep.mubr.bf16.mxu0 0
        %1883 = vmatmul.mubr.bf16.gmra.mrb[0].mxu0 %v1665
        %v1884 = vpop.f32.mrb[0].mxu0
        %v1885 = vadd.f32 %v1688, %v1884
        %v1886 = vpop.f32.mrb[0].mxu0
        %v1887 = vpop.f32.mrb[0].mxu0
        %v1888 = vadd.f32 %v1688, %v1887
        %v1889 = vpop.f32.mrb[0].mxu0
        %1890 = vmatprep.mubr.bf16.mxu0 0
        %1891 = vmatmul.mubr.bf16.gmra.mrb[0].mxu0 %v1666
        %v1892 = vpop.f32.mrb[0].mxu0
        %v1893 = vadd.f32 %v1688, %v1892
        %v1894 = vpop.f32.mrb[0].mxu0
        %v1895 = vpop.f32.mrb[0].mxu0
        %v1896 = vadd.f32 %v1688, %v1895
        %v1897 = vpop.f32.mrb[0].mxu0
        %1898 = vdwg.mxu0
        %v1899 = vsub.f32 0.0, %v1773
        %v1900 = vsub.f32 0.0, %v1776
        %v1901 = vsub.f32 0.0, %v1781
        %v1902 = vsub.f32 0.0, %v1784
        %v1903 = vsub.f32 0.0, %v1789
        %v1904 = vsub.f32 0.0, %v1792
        %v1905 = vsub.f32 0.0, %v1797
        %v1906 = vsub.f32 0.0, %v1800
        %v1907 = vsub.f32 0.0, %v1805
        %v1908 = vsub.f32 0.0, %v1808
        %v1909 = vsub.f32 0.0, %v1813
        %v1910 = vsub.f32 0.0, %v1816
        %v1911 = vsub.f32 0.0, %v1821
        %v1912 = vsub.f32 0.0, %v1824
        %v1913 = vsub.f32 0.0, %v1829
        %v1914 = vsub.f32 0.0, %v1832
        %v1915 = vsub.f32 0.0, %v1837
        %v1916 = vsub.f32 0.0, %v1840
        %v1917 = vsub.f32 0.0, %v1845
        %v1918 = vsub.f32 0.0, %v1848
        %v1919 = vsub.f32 0.0, %v1853
        %v1920 = vsub.f32 0.0, %v1856
        %v1921 = vsub.f32 0.0, %v1861
        %v1922 = vsub.f32 0.0, %v1864
        %v1923 = vsub.f32 0.0, %v1869
        %v1924 = vsub.f32 0.0, %v1872
        %v1925 = vsub.f32 0.0, %v1877
        %v1926 = vsub.f32 0.0, %v1880
        %v1927 = vsub.f32 0.0, %v1885
        %v1928 = vsub.f32 0.0, %v1888
        %v1929 = vsub.f32 0.0, %v1893
        %v1930 = vsub.f32 0.0, %v1896
        %v1931 = vmul.f32 %v1899, 1.442695
        %v1932 = vpow.pop %v1931
        %v1933 = vmul.f32 %v1900, 1.442695
        %v1934 = vpow.pop %v1933
        %v1935 = vmul.f32 %v1901, 1.442695
        %v1936 = vpow.pop %v1935
        %v1937 = vmul.f32 %v1902, 1.442695
        %v1938 = vpow.pop %v1937
        %v1939 = vmul.f32 %v1903, 1.442695
        %v1940 = vpow.pop %v1939
        %v1941 = vmul.f32 %v1904, 1.442695
        %v1942 = vpow.pop %v1941
        %v1943 = vmul.f32 %v1905, 1.442695
        %v1944 = vpow.pop %v1943
        %v1945 = vmul.f32 %v1906, 1.442695
        %v1946 = vpow.pop %v1945
        %v1947 = vmul.f32 %v1907, 1.442695
        %v1948 = vpow.pop %v1947
        %v1949 = vmul.f32 %v1908, 1.442695
        %v1950 = vpow.pop %v1949
        %v1951 = vmul.f32 %v1909, 1.442695
        %v1952 = vpow.pop %v1951
        %v1953 = vmul.f32 %v1910, 1.442695
        %v1954 = vpow.pop %v1953
        %v1955 = vmul.f32 %v1911, 1.442695
        %v1956 = vpow.pop %v1955
        %v1957 = vmul.f32 %v1912, 1.442695
        %v1958 = vpow.pop %v1957
        %v1959 = vmul.f32 %v1913, 1.442695
        %v1960 = vpow.pop %v1959
        %v1961 = vmul.f32 %v1914, 1.442695
        %v1962 = vpow.pop %v1961
        %v1963 = vmul.f32 %v1915, 1.442695
        %v1964 = vpow.pop %v1963
        %v1965 = vmul.f32 %v1916, 1.442695
        %v1966 = vpow.pop %v1965
        %v1967 = vmul.f32 %v1917, 1.442695
        %v1968 = vpow.pop %v1967
        %v1969 = vmul.f32 %v1918, 1.442695
        %v1970 = vpow.pop %v1969
        %v1971 = vmul.f32 %v1919, 1.442695
        %v1972 = vpow.pop %v1971
        %v1973 = vmul.f32 %v1920, 1.442695
        %v1974 = vpow.pop %v1973
        %v1975 = vmul.f32 %v1921, 1.442695
        %v1976 = vpow.pop %v1975
        %v1977 = vmul.f32 %v1922, 1.442695
        %v1978 = vpow.pop %v1977
        %v1979 = vmul.f32 %v1923, 1.442695
        %v1980 = vpow.pop %v1979
        %v1981 = vmul.f32 %v1924, 1.442695
        %v1982 = vpow.pop %v1981
        %v1983 = vmul.f32 %v1925, 1.442695
        %v1984 = vpow.pop %v1983
        %v1985 = vmul.f32 %v1926, 1.442695
        %v1986 = vpow.pop %v1985
        %v1987 = vmul.f32 %v1927, 1.442695
        %v1988 = vpow.pop %v1987
        %v1989 = vmul.f32 %v1928, 1.442695
        %v1990 = vpow.pop %v1989
        %v1991 = vmul.f32 %v1929, 1.442695
        %v1992 = vpow.pop %v1991
        %v1993 = vmul.f32 %v1930, 1.442695
        %v1994 = vpow.pop %v1993
        %v1995 = vadd.f32 %v1932, 1.0
        %v1996 = vadd.f32 %v1934, 1.0
        %v1997 = vadd.f32 %v1936, 1.0
        %v1998 = vadd.f32 %v1938, 1.0
        %v1999 = vadd.f32 %v1940, 1.0
        %v2000 = vadd.f32 %v1942, 1.0
        %v2001 = vadd.f32 %v1944, 1.0
        %v2002 = vadd.f32 %v1946, 1.0
        %v2003 = vadd.f32 %v1948, 1.0
        %v2004 = vadd.f32 %v1950, 1.0
        %v2005 = vadd.f32 %v1952, 1.0
        %v2006 = vadd.f32 %v1954, 1.0
        %v2007 = vadd.f32 %v1956, 1.0
        %v2008 = vadd.f32 %v1958, 1.0
        %v2009 = vadd.f32 %v1960, 1.0
        %v2010 = vadd.f32 %v1962, 1.0
        %v2011 = vadd.f32 %v1964, 1.0
        %v2012 = vadd.f32 %v1966, 1.0
        %v2013 = vadd.f32 %v1968, 1.0
        %v2014 = vadd.f32 %v1970, 1.0
        %v2015 = vadd.f32 %v1972, 1.0
        %v2016 = vadd.f32 %v1974, 1.0
        %v2017 = vadd.f32 %v1976, 1.0
        %v2018 = vadd.f32 %v1978, 1.0
        %v2019 = vadd.f32 %v1980, 1.0
        %v2020 = vadd.f32 %v1982, 1.0
        %v2021 = vadd.f32 %v1984, 1.0
        %v2022 = vadd.f32 %v1986, 1.0
        %v2023 = vadd.f32 %v1988, 1.0
        %v2024 = vadd.f32 %v1990, 1.0
        %v2025 = vadd.f32 %v1992, 1.0
        %v2026 = vadd.f32 %v1994, 1.0
        %v2027 = vrcp.pop %v1995
        %v2028 = vrcp.pop %v1996
        %v2029 = vrcp.pop %v1997
        %v2030 = vrcp.pop %v1998
        %v2031 = vrcp.pop %v1999
        %v2032 = vrcp.pop %v2000
        %v2033 = vrcp.pop %v2001
        %v2034 = vrcp.pop %v2002
        %v2035 = vrcp.pop %v2003
        %v2036 = vrcp.pop %v2004
        %v2037 = vrcp.pop %v2005
        %v2038 = vrcp.pop %v2006
        %v2039 = vrcp.pop %v2007
        %v2040 = vrcp.pop %v2008
        %v2041 = vrcp.pop %v2009
        %v2042 = vrcp.pop %v2010
        %v2043 = vrcp.pop %v2011
        %v2044 = vrcp.pop %v2012
        %v2045 = vrcp.pop %v2013
        %v2046 = vrcp.pop %v2014
        %v2047 = vrcp.pop %v2015
        %v2048 = vrcp.pop %v2016
        %v2049 = vrcp.pop %v2017
        %v2050 = vrcp.pop %v2018
        %v2051 = vrcp.pop %v2019
        %v2052 = vrcp.pop %v2020
        %v2053 = vrcp.pop %v2021
        %v2054 = vrcp.pop %v2022
        %v2055 = vrcp.pop %v2023
        %v2056 = vrcp.pop %v2024
        %v2057 = vrcp.pop %v2025
        %v2058 = vrcp.pop %v2026
        %v2059 = vpack.c.bf16 %v2028, %v2027
        %v2060 = vpack.c.bf16 %v2030, %v2029
        %v2061 = vpack.c.bf16 %v2032, %v2031
        %v2062 = vpack.c.bf16 %v2034, %v2033
        %v2063 = vpack.c.bf16 %v2036, %v2035
        %v2064 = vpack.c.bf16 %v2038, %v2037
        %v2065 = vpack.c.bf16 %v2040, %v2039
        %v2066 = vpack.c.bf16 %v2042, %v2041
        %v2067 = vpack.c.bf16 %v2044, %v2043
        %v2068 = vpack.c.bf16 %v2046, %v2045
        %v2069 = vpack.c.bf16 %v2048, %v2047
        %v2070 = vpack.c.bf16 %v2050, %v2049
        %v2071 = vpack.c.bf16 %v2052, %v2051
        %v2072 = vpack.c.bf16 %v2054, %v2053
        %v2073 = vpack.c.bf16 %v2056, %v2055
        %v2074 = vpack.c.bf16 %v2058, %v2057
        %v2091 = vunpack.c.l.b16 %v2059
        %v2092 = vunpack.c.h.b16 %v2059
        %v2093 = vunpack.c.l.b16 %v2060
        %v2094 = vunpack.c.h.b16 %v2060
        %v2095 = vunpack.c.l.b16 %v2061
        %v2096 = vunpack.c.h.b16 %v2061
        %v2097 = vunpack.c.l.b16 %v2062
        %v2098 = vunpack.c.h.b16 %v2062
        %v2099 = vunpack.c.l.b16 %v2063
        %v2100 = vunpack.c.h.b16 %v2063
        %v2101 = vunpack.c.l.b16 %v2064
        %v2102 = vunpack.c.h.b16 %v2064
        %v2103 = vunpack.c.l.b16 %v2065
        %v2104 = vunpack.c.h.b16 %v2065
        %v2105 = vunpack.c.l.b16 %v2066
        %v2106 = vunpack.c.h.b16 %v2066
        %v2107 = vunpack.c.l.b16 %v2067
        %v2108 = vunpack.c.h.b16 %v2067
        %v2109 = vunpack.c.l.b16 %v2068
        %v2110 = vunpack.c.h.b16 %v2068
        %v2111 = vunpack.c.l.b16 %v2069
        %v2112 = vunpack.c.h.b16 %v2069
        %v2113 = vunpack.c.l.b16 %v2070
        %v2114 = vunpack.c.h.b16 %v2070
        %v2115 = vunpack.c.l.b16 %v2071
        %v2116 = vunpack.c.h.b16 %v2071
        %v2117 = vunpack.c.l.b16 %v2072
        %v2118 = vunpack.c.h.b16 %v2072
        %v2119 = vunpack.c.l.b16 %v2073
        %v2120 = vunpack.c.h.b16 %v2073
        %v2121 = vunpack.c.l.b16 %v2074
        %v2122 = vunpack.c.h.b16 %v2074
        %v2123 = vpack.c.b16 %v2091, %v2091
        %v2124 = vpack.c.b16 %v2092, %v2092
        %v2125 = vpack.c.b16 %v2093, %v2093
        %v2126 = vpack.c.b16 %v2094, %v2094
        %v2127 = vpack.c.b16 %v2095, %v2095
        %v2128 = vpack.c.b16 %v2096, %v2096
        %v2129 = vpack.c.b16 %v2097, %v2097
        %v2130 = vpack.c.b16 %v2098, %v2098
        %v2131 = vpack.c.b16 %v2099, %v2099
        %v2132 = vpack.c.b16 %v2100, %v2100
        %v2133 = vpack.c.b16 %v2101, %v2101
        %v2134 = vpack.c.b16 %v2102, %v2102
        %v2135 = vpack.c.b16 %v2103, %v2103
        %v2136 = vpack.c.b16 %v2104, %v2104
        %v2137 = vpack.c.b16 %v2105, %v2105
        %v2138 = vpack.c.b16 %v2106, %v2106
        %v2139 = vpack.c.b16 %v2107, %v2107
        %v2140 = vpack.c.b16 %v2108, %v2108
        %v2141 = vpack.c.b16 %v2109, %v2109
        %v2142 = vpack.c.b16 %v2110, %v2110
        %v2143 = vpack.c.b16 %v2111, %v2111
        %v2144 = vpack.c.b16 %v2112, %v2112
        %v2145 = vpack.c.b16 %v2113, %v2113
        %v2146 = vpack.c.b16 %v2114, %v2114
        %v2147 = vpack.c.b16 %v2115, %v2115
        %v2148 = vpack.c.b16 %v2116, %v2116
        %v2149 = vpack.c.b16 %v2117, %v2117
        %v2150 = vpack.c.b16 %v2118, %v2118
        %v2151 = vpack.c.b16 %v2119, %v2119
        %v2152 = vpack.c.b16 %v2120, %v2120
        %v2153 = vpack.c.b16 %v2121, %v2121
        %v2154 = vpack.c.b16 %v2122, %v2122
        %2187 = vst [vmem:[%s509] sm:$0xf] %v2123
        %2188 = vst [vmem:[%s509 + $0x4] sm:$0xf] %v2124
        %2189 = vst [vmem:[%s509 + $0x8] sm:$0xf] %v2125
        %2190 = vst [vmem:[%s509 + $0xc] sm:$0xf] %v2126
        %2191 = vst [vmem:[%s509 + $0x10] sm:$0xf] %v2127
        %2192 = vst [vmem:[%s509 + $0x14] sm:$0xf] %v2128
        %2193 = vst [vmem:[%s509 + $0x18] sm:$0xf] %v2129
        %2194 = vst [vmem:[%s509 + $0x1c] sm:$0xf] %v2130
        %2195 = vst [vmem:[%s509 + $0x20] sm:$0xf] %v2131
        %2196 = vst [vmem:[%s509 + $0x24] sm:$0xf] %v2132
        %2197 = vst [vmem:[%s509 + $0x28] sm:$0xf] %v2133
        %2198 = vst [vmem:[%s509 + $0x2c] sm:$0xf] %v2134
        %2199 = vst [vmem:[%s509 + $0x30] sm:$0xf] %v2135
        %2200 = vst [vmem:[%s509 + $0x34] sm:$0xf] %v2136
        %2201 = vst [vmem:[%s509 + $0x38] sm:$0xf] %v2137
        %2202 = vst [vmem:[%s509 + $0x3c] sm:$0xf] %v2138
        %2203 = vst [vmem:[%s509 + $0x40] sm:$0xf] %v2139
        %2204 = vst [vmem:[%s509 + $0x44] sm:$0xf] %v2140
        %2205 = vst [vmem:[%s509 + $0x48] sm:$0xf] %v2141
        %2206 = vst [vmem:[%s509 + $0x4c] sm:$0xf] %v2142
        %2207 = vst [vmem:[%s509 + $0x50] sm:$0xf] %v2143
        %2208 = vst [vmem:[%s509 + $0x54] sm:$0xf] %v2144
        %2209 = vst [vmem:[%s509 + $0x58] sm:$0xf] %v2145
        %2210 = vst [vmem:[%s509 + $0x5c] sm:$0xf] %v2146
        %2211 = vst [vmem:[%s509 + $0x60] sm:$0xf] %v2147
        %2212 = vst [vmem:[%s509 + $0x64] sm:$0xf] %v2148
        %2213 = vst [vmem:[%s509 + $0x68] sm:$0xf] %v2149
        %2214 = vst [vmem:[%s509 + $0x6c] sm:$0xf] %v2150
        %2215 = vst [vmem:[%s509 + $0x70] sm:$0xf] %v2151
        %2216 = vst [vmem:[%s509 + $0x74] sm:$0xf] %v2152
        %2217 = vst [vmem:[%s509 + $0x78] sm:$0xf] %v2153
        %2218 = vst [vmem:[%s509 + $0x7c] sm:$0xf] %v2154
        %s2219 = sand.u32 %s310, 1
        %s2220 = scalar_lea.sflag [#allocation3], %s2219
        %s2221 = sand.u32 %s310, 1
        %s2222 = smul.addr %s2221, 128
        %s2223 = scalar_lea.vmem [#allocation2], %s2222
        // Predicated region
        $region61: #{tpu_custom_call.1} parent=59 // pred_check
          %p2224 = pneg %p320
        $region62: #{tpu_custom_call.1} parent=59 // pred_check_branch
          %2226 = sbr.rel (%p2224) target = $region64
        $region63: #{tpu_custom_call.1} parent=59 // pred_region
          %s2227 = smul.u32 32, %s29
          %s2229 = ssub.s32 2048, 2048
          %2230 = vsyncadd %s2220, %s2229
          %s2231 = smul.addr %s28, 32
          %s2232 = sadd.s32 %s2227, %s2231
          %s2233 = smul.addr %s2232, 64
          %s2234 = scalar_lea.hbm %s10, %s2233
          %s2235 = sshll.u32 %s2223, 4
          %s2236 = int_to_ptr.vmem [resolvable:$true] %s2235
          %2241 = dma.vmem_to_hbm [thread:$0]  %s2236, 2048, %s2234, %s2220, 64, 64, 4
        $region64: #{tpu_custom_call.1} parent=59 // pred_fallthru
          _
      $region60: #{tpu_custom_call.1} parent=5 // pred_fallthru
        _
      %p2242 = scmp.le.s32.totalorder 2, %s19
      // Predicated region
      $region65: #{tpu_custom_call.1} parent=5 // pred_check
        %p2243 = pneg %p2242
      $region66: #{tpu_custom_call.1} parent=5 // pred_check_branch
        %2245 = sbr.rel (%p2243) target = $region68
      $region67: #{tpu_custom_call.1} parent=5 // pred_region
        %s2246 = ssub.s32 %s19, 2
        // Predicated region
        $region69: #{tpu_custom_call.1} parent=67 // pred_check
          %p2247 = pneg %p326
        $region70: #{tpu_custom_call.1} parent=67 // pred_check_branch
          %2249 = sbr.rel (%p2247) target = $region72
        $region71: #{tpu_custom_call.1} parent=67 // pred_region
          %s2250 = sand.u32 %s311, 1
          %s2251 = scalar_lea.sflag [#allocation3], %s2250
          %s2252 = sand.u32 %s311, 1
          %s2253 = smul.addr %s2252, 128
          %s2254 = scalar_lea.vmem [#allocation2], %s2253
          %2255 = dma.done %s2251, 2048
        $region72: #{tpu_custom_call.1} parent=67 // pred_fallthru
          _
      $region68: #{tpu_custom_call.1} parent=5 // pred_fallthru
        _
    $region6: #{tpu_custom_call.1} parent=1 // loop_footer
      %s23 = sadd.s32 1, %s19
    $region7: #{tpu_custom_call.1} parent=1 // loop_footer_branch
      %18 = sbr.rel target = $region3
    $region8: #{tpu_custom_call.1} parent=1 // loop_exit
      _
    %2256 = vsyncpa [#allocation3], 1
    %s2257 = scalar_lea.sflag [#allocation3], 1
    %2258 = vsyncpa %s2257, 1

</llo_original>
